<compile_context>
chip_gen: v7x
topology: tpu7x:2x2x1
jax: 0.10.0
libtpu: 0.0.40
codegen_flags: <defaults>
</compile_context>

<pallas_src>
import math
from functools import partial

import jax
import jax.numpy as jnp
from jax.experimental import pallas as pl
from jax.experimental.pallas import tpu as pltpu

# ---- config -----------------------------------------------------------------
N_EMBD = 32
N_HEAD = 4
N_KV_HEAD = 2
HEAD_DIM = N_EMBD // N_HEAD          # 8
G = N_HEAD // N_KV_HEAD              # GQA repeat factor (2)
ROPE_THETA = 10000.0
MAX_SEQ = 1024
B, T = 2, 8

# Fused projection column layout (padded to one 128-lane vreg width):
#   [0:32)    q  (head-major, pre-scaled by 1/sqrt(head_dim))
#   [32:48)   k  (kv-head-major)
#   [48:64)   v  (kv-head-major)
#   [64:96)   "rotate-half" q projection (for RoPE)
#   [96:112)  "rotate-half" k projection (for RoPE)
#   [112:128) zero padding
Q_W = N_HEAD * HEAD_DIM              # 32
KV_W = N_KV_HEAD * HEAD_DIM          # 16
LIN_W = Q_W + 2 * KV_W               # 64
FUSED_N = 128


# ---- fused Pallas kernel (whole forward, one grid step) ----------------------
def _fused_attention_kernel(x_ref, wf_ref, ca_ref, sa_ref, cw_ref, o_ref, *, b, t):
    x2 = x_ref[...]                                                  # (B*T, C)

    # Fused projections: q | k | v | q_rot | k_rot in one lane-dense matmul.
    z = jnp.dot(x2, wf_ref[...], preferred_element_type=jnp.float32)  # (B*T, 128)

    # RoPE: roped = z * cos_tab + roll(z, 64) * sin_tab.
    # The half-width lane roll aligns the pre-permuted "rotate-half" columns
    # under their linear counterparts; v passes through (cos=1, sin=0 there).
    zr = pltpu.roll(z, shift=FUSED_N // 2, axis=1)
    rp = z * ca_ref[...] + zr * sa_ref[...]                          # (B*T, 128)

    q2 = rp[:, :Q_W]                                 # (B*T, H*Dh), pre-scaled
    kv2 = rp[:, Q_W:LIN_W]                           # (B*T, 2*KVH*Dh) = k | v

    # GQA regroup: one reshape+transpose per operand (no per-head loops).
    #   qg: (B*KVH, G*T, Dh) -- the G query heads of a kv group stacked on rows
    #   kg/vg: (B*KVH, T, Dh)
    qg = q2.reshape(b, t, N_HEAD, HEAD_DIM)
    qg = jnp.transpose(qg, (0, 2, 1, 3)).reshape(b * N_KV_HEAD, G * t, HEAD_DIM)
    kv4 = kv2.reshape(b, t, 2 * N_KV_HEAD, HEAD_DIM)
    kv4 = jnp.transpose(kv4, (0, 2, 1, 3))                           # (B, 2*KVH, T, Dh)
    kg = kv4[:, :N_KV_HEAD].reshape(b * N_KV_HEAD, t, HEAD_DIM)
    vg = kv4[:, N_KV_HEAD:].reshape(b * N_KV_HEAD, t, HEAD_DIM)

    # Batched scores: one dot_general for all (batch, kv-head) pairs.
    s = jnp.einsum("bqd,bkd->bqk", qg, kg,
                   preferred_element_type=jnp.float32)               # (B*KVH, G*T, T)

    # Causal mask as an additive bias built from a (G, T, T) iota (no concat).
    # NOTE: strict causal masking never yields a fully-masked row; reusing this
    # with arbitrary masks would give uniform 1/T attention on masked-out rows.
    qpos = jax.lax.broadcasted_iota(jnp.int32, (G, t, t), 1)
    kpos = jax.lax.broadcasted_iota(jnp.int32, (G, t, t), 2)
    bias = jnp.where(kpos > qpos, jnp.float32(-1e30),
                     jnp.float32(0.0)).reshape(G * t, t)
    s = s + bias[None, :, :]

    # Softmax (exact denominator division -- see review correctness note).
    m = jnp.max(s, axis=-1, keepdims=True)
    e = jnp.exp(s - m)
    p = e / jnp.sum(e, axis=-1, keepdims=True)

    out = jnp.einsum("bqk,bkd->bqd", p, vg,
                     preferred_element_type=jnp.float32)             # (B*KVH, G*T, Dh)

    # Head reassembly folded into the output projection: one reshape+transpose
    # back to (B*T, C) head-major columns, then a single c_proj matmul.
    y = jnp.transpose(out.reshape(b, N_HEAD, t, HEAD_DIM), (0, 2, 1, 3))
    y = y.reshape(b * t, N_EMBD)
    o_ref[...] = jnp.dot(y, cw_ref[...],
                         preferred_element_type=jnp.float32).astype(o_ref.dtype)
    # TODO(synk): attn_dropout / resid_dropout are identity (dropout=0.0, eval).


def attention_forward(x, params):
    """Pallas-backed forward matching Attention.forward(x) (flash branch)."""
    b, t, c = x.shape
    bt = b * t
    x2 = x.reshape(bt, c)                                # free layout plumbing
    ca = jnp.tile(params["rope_cos"][:t], (b, 1))        # (B*T, 128)
    sa = jnp.tile(params["rope_sin"][:t], (b, 1))        # (B*T, 128)
    kernel = partial(_fused_attention_kernel, b=b, t=t)
    out2 = pl.pallas_call(
        kernel,
        out_shape=jax.ShapeDtypeStruct((bt, c), jnp.float32),
        grid=(1,),
        in_specs=[
            pl.BlockSpec((bt, c), lambda i: (0, 0)),           # x (B*T, C)
            pl.BlockSpec((c, FUSED_N), lambda i: (0, 0)),      # fused qkv(+rot) W
            pl.BlockSpec((bt, FUSED_N), lambda i: (0, 0)),     # rope cos table
            pl.BlockSpec((bt, FUSED_N), lambda i: (0, 0)),     # rope sin table
            pl.BlockSpec((c, c), lambda i: (0, 0)),            # c_proj W^T
        ],
        out_specs=pl.BlockSpec((bt, c), lambda i: (0, 0)),
        compiler_params=pltpu.CompilerParams(
            dimension_semantics=("arbitrary",)),
    )(x2, params["w_fused"], ca, sa, params["c_wt"])
    return out2.reshape(b, t, c)


# ---- parameter init (canonical weights + derived kernel constants) -----------
def rotary_tables(seq_len, dim, base):
    inv_freq = 1.0 / base ** (jnp.arange(0, dim, 2, dtype=jnp.float32) / dim)
    t = jnp.arange(seq_len, dtype=jnp.float32)
    freqs = jnp.outer(t, inv_freq)                       # (seq_len, dim/2)
    return jnp.cos(freqs), jnp.sin(freqs)


def _rotate_half_cols(w, dh):
    """Permute/sign-flip output columns so that x @ w' == rotate_half(x @ w)."""
    c_in, n = w.shape
    half = dh // 2
    w3 = w.reshape(c_in, n // dh, dh)
    w3 = jnp.concatenate([w3[:, :, half:], -w3[:, :, :half]], axis=-1)
    return w3.reshape(c_in, n)


def init_params(key):
    k1, k2, k3 = jax.random.split(key, 3)
    kv_out = 2 * N_EMBD // G                             # 32
    # canonical nn.Linear weights, stored pre-transposed as (in, out)
    q_wt = 0.02 * jax.random.normal(k1, (N_EMBD, N_EMBD), jnp.float32)
    kv_wt = 0.02 * jax.random.normal(k2, (N_EMBD, kv_out), jnp.float32)
    c_wt = 0.02 * jax.random.normal(k3, (N_EMBD, N_EMBD), jnp.float32)
    cos, sin = rotary_tables(MAX_SEQ, HEAD_DIM, ROPE_THETA)      # (S, Dh/2)

    # ---- derived kernel-side constants (built once, not per call) -----------
    scale = 1.0 / math.sqrt(HEAD_DIM)
    wq = q_wt * scale                       # fold 1/sqrt(Dh) into the q columns
    wk = kv_wt[:, :KV_W]
    wv = kv_wt[:, KV_W:]
    w_fused = jnp.concatenate(
        [wq, wk, wv,
         _rotate_half_cols(wq, HEAD_DIM),
         _rotate_half_cols(wk, HEAD_DIM),
         jnp.zeros((N_EMBD, FUSED_N - LIN_W - Q_W - KV_W), jnp.float32)],
        axis=1)                                                  # (C, 128)

    cos_d = jnp.concatenate([cos, cos], axis=-1)                 # (S, Dh)
    sin_d = jnp.concatenate([sin, sin], axis=-1)
    rope_cos = jnp.concatenate(
        [jnp.tile(cos_d, (1, N_HEAD)), jnp.tile(cos_d, (1, N_KV_HEAD)),
         jnp.ones((MAX_SEQ, KV_W), jnp.float32),
         jnp.zeros((MAX_SEQ, FUSED_N - LIN_W), jnp.float32)],
        axis=1)                                                  # (S, 128)
    rope_sin = jnp.concatenate(
        [jnp.tile(sin_d, (1, N_HEAD)), jnp.tile(sin_d, (1, N_KV_HEAD)),
         jnp.zeros((MAX_SEQ, KV_W), jnp.float32),
         jnp.zeros((MAX_SEQ, FUSED_N - LIN_W), jnp.float32)],
        axis=1)                                                  # (S, 128)

    return {
        "q_wt": q_wt, "kv_wt": kv_wt, "c_wt": c_wt, "cos": cos, "sin": sin,
        "w_fused": w_fused, "rope_cos": rope_cos, "rope_sin": rope_sin,
    }


# ---- pure-JAX reference (mirrors the PyTorch flash branch step by step) ------
def apply_rotary_emb_ref(x, cos, sin):
    # x: (B, T, H, Dh); cos/sin: (T, Dh/2) -- mirrors torch apply_rotary_emb
    d = x.shape[-1] // 2
    x1, x2 = x[..., :d], x[..., d:]
    c = cos[None, :, None, :]
    s = sin[None, :, None, :]
    return jnp.concatenate([x1 * c + x2 * s, -x1 * s + x2 * c], axis=-1)


def reference_forward(x, params):
    b, t, c = x.shape
    x2d = x.reshape(b * t, c)
    q = (x2d @ params["q_wt"]).reshape(b, t, N_HEAD, HEAD_DIM)
    kv = (x2d @ params["kv_wt"]).reshape(b, t, 2, N_KV_HEAD, HEAD_DIM)
    k, v = kv[:, :, 0], kv[:, :, 1]
    cos, sin = params["cos"][:t], params["sin"][:t]
    q = apply_rotary_emb_ref(q, cos, sin)
    k = apply_rotary_emb_ref(k, cos, sin)
    q = q.transpose(0, 2, 1, 3)
    k = jnp.repeat(k.transpose(0, 2, 1, 3), G, axis=1)   # repeat_interleave(dim=1)
    v = jnp.repeat(v.transpose(0, 2, 1, 3), G, axis=1)
    s = jnp.einsum("bhqd,bhkd->bhqk", q, k) / math.sqrt(HEAD_DIM)
    mask = jnp.triu(jnp.ones((t, t), bool), 1)
    s = jnp.where(mask[None, None], -jnp.inf, s)
    p = jax.nn.softmax(s, axis=-1)
    y = jnp.einsum("bhqk,bhkd->bhqd", p, v)
    y = y.transpose(0, 2, 1, 3).reshape(b * t, c)
    return (y @ params["c_wt"]).reshape(b, t, c)


if __name__ == "__main__":
    key = jax.random.PRNGKey(0)
    pkey, xkey = jax.random.split(key)
    params = init_params(pkey)
    x = jax.random.normal(xkey, (B, T, N_EMBD), jnp.float32)

    fwd = jax.jit(attention_forward)
    out = jax.block_until_ready(fwd(x, params))

    ref = reference_forward(x, params)
    assert out.shape == (B, T, N_EMBD)
    assert jnp.allclose(out, ref, rtol=1e-3, atol=1e-4), "mismatch vs reference"
    print("KERNEL_OK")
</pallas_src>

<mosaic_0001>
module attributes {stable_mosaic.version = 11 : i64} {
  func.func @_fused_attention_kernel(%arg0: i32, %arg1: memref<16x32xf32, #tpu.memory_space<vmem>>, %arg2: memref<32x128xf32, #tpu.memory_space<vmem>>, %arg3: memref<16x128xf32, #tpu.memory_space<vmem>>, %arg4: memref<16x128xf32, #tpu.memory_space<vmem>>, %arg5: memref<32x32xf32, #tpu.memory_space<vmem>>, %arg6: memref<16x32xf32, #tpu.memory_space<vmem>>) attributes {dimension_semantics = [#tpu.dimension_semantics<arbitrary>], iteration_bounds = array<i64: 1>, scalar_prefetch = 0 : i64, scratch_operands = 0 : i64, tpu.core_type = #tpu.core_type<tc>, window_params = [{pipeline_mode = #tpu.pipeline_mode<synchronous>, transform_indices = @transform_0, window_bounds = array<i64: 16, 32>}, {pipeline_mode = #tpu.pipeline_mode<synchronous>, transform_indices = @transform_1, window_bounds = array<i64: 32, 128>}, {pipeline_mode = #tpu.pipeline_mode<synchronous>, transform_indices = @transform_2, window_bounds = array<i64: 16, 128>}, {pipeline_mode = #tpu.pipeline_mode<synchronous>, transform_indices = @transform_3, window_bounds = array<i64: 16, 128>}, {pipeline_mode = #tpu.pipeline_mode<synchronous>, transform_indices = @transform_4, window_bounds = array<i64: 32, 32>}, {pipeline_mode = #tpu.pipeline_mode<synchronous>, transform_indices = @transform_5, window_bounds = array<i64: 16, 32>}]} {
    %c0 = arith.constant 0 : index
    %c0_0 = arith.constant 0 : index
    %0 = vector.load %arg1[%c0, %c0_0] : memref<16x32xf32, #tpu.memory_space<vmem>>, vector<16x32xf32>
    %c0_1 = arith.constant 0 : index
    %c0_2 = arith.constant 0 : index
    %1 = vector.load %arg2[%c0_1, %c0_2] : memref<32x128xf32, #tpu.memory_space<vmem>>, vector<32x128xf32>
    %cst = arith.constant dense<0.000000e+00> : vector<16x128xf32>
    %2 = tpu.matmul %0, %1, %cst {dimension_numbers = #tpu.dot_dimension_numbers<[1], [0], [0], [1], [0, 0, 1, 1], [], []>} : vector<16x32xf32>, vector<32x128xf32>, vector<16x128xf32> -> vector<16x128xf32>
    %c64_i32 = arith.constant 64 : i32
    %3 = tpu.dynamic_rotate %2 by %c64_i32 dim 1 : vector<16x128xf32>, i32 -> vector<16x128xf32>
    %c0_3 = arith.constant 0 : index
    %c0_4 = arith.constant 0 : index
    %4 = vector.load %arg3[%c0_3, %c0_4] : memref<16x128xf32, #tpu.memory_space<vmem>>, vector<16x128xf32>
    %5 = arith.mulf %2, %4 : vector<16x128xf32>
    %c0_5 = arith.constant 0 : index
    %c0_6 = arith.constant 0 : index
    %6 = vector.load %arg4[%c0_5, %c0_6] : memref<16x128xf32, #tpu.memory_space<vmem>>, vector<16x128xf32>
    %7 = arith.mulf %3, %6 : vector<16x128xf32>
    %8 = arith.addf %5, %7 : vector<16x128xf32>
    %9 = vector.extract_strided_slice %8 {offsets = [0, 0], sizes = [16, 32], strides = [1, 1]} : vector<16x128xf32> to vector<16x32xf32>
    %10 = vector.extract_strided_slice %8 {offsets = [0, 32], sizes = [16, 32], strides = [1, 1]} : vector<16x128xf32> to vector<16x32xf32>
    %11 = vector.shape_cast %9 : vector<16x32xf32> to vector<2x8x4x8xf32>
    %12 = tpu.transpose %11, [0, 2, 1, 3] : vector<2x8x4x8xf32> -> vector<2x4x8x8xf32>
    %13 = vector.shape_cast %12 : vector<2x4x8x8xf32> to vector<4x16x8xf32>
    %14 = vector.shape_cast %10 : vector<16x32xf32> to vector<2x8x4x8xf32>
    %15 = tpu.transpose %14, [0, 2, 1, 3] : vector<2x8x4x8xf32> -> vector<2x4x8x8xf32>
    %16 = vector.extract_strided_slice %15 {offsets = [0, 0, 0, 0], sizes = [2, 2, 8, 8], strides = [1, 1, 1, 1]} : vector<2x4x8x8xf32> to vector<2x2x8x8xf32>
    %17 = vector.shape_cast %16 : vector<2x2x8x8xf32> to vector<4x8x8xf32>
    %18 = vector.extract_strided_slice %15 {offsets = [0, 2, 0, 0], sizes = [2, 2, 8, 8], strides = [1, 1, 1, 1]} : vector<2x4x8x8xf32> to vector<2x2x8x8xf32>
    %19 = vector.shape_cast %18 : vector<2x2x8x8xf32> to vector<4x8x8xf32>
    "tpu.trace_start"() <{level = 10 : i32, message = "bqd,bkd->bqk"}> : () -> ()
    %cst_7 = arith.constant dense<0.000000e+00> : vector<4x16x8xf32>
    %20 = tpu.matmul %13, %17, %cst_7 {dimension_numbers = #tpu.dot_dimension_numbers<[2], [2], [1], [1], [0, 0, 0, 1, 1, 1], [0], [0]>} : vector<4x16x8xf32>, vector<4x8x8xf32>, vector<4x16x8xf32> -> vector<4x16x8xf32>
    "tpu.trace_stop"() : () -> ()
    %21 = tpu.iota {dimensions = array<i32: 1>} : vector<2x8x8xi32>
    %22 = tpu.iota {dimensions = array<i32: 2>} : vector<2x8x8xi32>
    %23 = arith.cmpi sgt, %22, %21 : vector<2x8x8xi32>
    %cst_8 = arith.constant -1.000000e+30 : f32
    %cst_9 = arith.constant 0.000000e+00 : f32
    %24 = vector.broadcast %cst_8 : f32 to vector<2x8x8xf32>
    %25 = vector.broadcast %cst_9 : f32 to vector<2x8x8xf32>
    %26 = arith.select %23, %24, %25 : vector<2x8x8xi1>, vector<2x8x8xf32>
    %27 = vector.shape_cast %26 : vector<2x8x8xf32> to vector<16x8xf32>
    %28 = vector.shape_cast %27 : vector<16x8xf32> to vector<1x16x8xf32>
    %29 = vector.broadcast %28 : vector<1x16x8xf32> to vector<4x16x8xf32>
    %30 = arith.addf %20, %29 : vector<4x16x8xf32>
    %cst_10 = arith.constant dense<0xFF800000> : vector<4x16xf32>
    %31 = vector.multi_reduction <maximumf>, %30, %cst_10 [2] : vector<4x16x8xf32> to vector<4x16xf32>
    %32 = vector.shape_cast %31 : vector<4x16xf32> to vector<4x16x1xf32>
    %33 = vector.broadcast %32 : vector<4x16x1xf32> to vector<4x16x8xf32>
    %34 = arith.subf %30, %33 : vector<4x16x8xf32>
    %35 = math.exp %34 : vector<4x16x8xf32>
    %cst_11 = arith.constant dense<0.000000e+00> : vector<4x16xf32>
    %36 = vector.multi_reduction <add>, %35, %cst_11 [2] : vector<4x16x8xf32> to vector<4x16xf32>
    %37 = vector.shape_cast %36 : vector<4x16xf32> to vector<4x16x1xf32>
    %38 = vector.broadcast %37 : vector<4x16x1xf32> to vector<4x16x8xf32>
    %39 = arith.divf %35, %38 : vector<4x16x8xf32>
    "tpu.trace_start"() <{level = 10 : i32, message = "bqk,bkd->bqd"}> : () -> ()
    %cst_12 = arith.constant dense<0.000000e+00> : vector<4x16x8xf32>
    %40 = tpu.matmul %39, %19, %cst_12 {dimension_numbers = #tpu.dot_dimension_numbers<[2], [1], [1], [2], [0, 0, 0, 1, 1, 2], [0], [0]>} : vector<4x16x8xf32>, vector<4x8x8xf32>, vector<4x16x8xf32> -> vector<4x16x8xf32>
    "tpu.trace_stop"() : () -> ()
    %41 = vector.shape_cast %40 : vector<4x16x8xf32> to vector<2x4x8x8xf32>
    %42 = tpu.transpose %41, [0, 2, 1, 3] : vector<2x4x8x8xf32> -> vector<2x8x4x8xf32>
    %43 = vector.shape_cast %42 : vector<2x8x4x8xf32> to vector<16x32xf32>
    %c0_13 = arith.constant 0 : index
    %c0_14 = arith.constant 0 : index
    %44 = vector.load %arg5[%c0_13, %c0_14] : memref<32x32xf32, #tpu.memory_space<vmem>>, vector<32x32xf32>
    %cst_15 = arith.constant dense<0.000000e+00> : vector<16x32xf32>
    %45 = tpu.matmul %43, %44, %cst_15 {dimension_numbers = #tpu.dot_dimension_numbers<[1], [0], [0], [1], [0, 0, 1, 1], [], []>} : vector<16x32xf32>, vector<32x32xf32>, vector<16x32xf32> -> vector<16x32xf32>
    %c0_16 = arith.constant 0 : index
    %c0_17 = arith.constant 0 : index
    %46 = vector.load %arg6[%c0_16, %c0_17] : memref<16x32xf32, #tpu.memory_space<vmem>>, vector<16x32xf32>
    tpu.vector_store %arg6[%c0_16, %c0_17], %45 {strides = array<i32>} : memref<16x32xf32, #tpu.memory_space<vmem>>, vector<16x32xf32>,
    return
  }
  func.func @transform_0(%arg0: i32) -> (i32, i32) {
    %c0_i32 = arith.constant 0 : i32
    %c0_i32_0 = arith.constant 0 : i32
    %c0_i32_1 = arith.constant 0 : i32
    return %c0_i32, %c0_i32_0 : i32, i32
  }
  func.func @transform_1(%arg0: i32) -> (i32, i32) {
    %c0_i32 = arith.constant 0 : i32
    %c0_i32_0 = arith.constant 0 : i32
    %c0_i32_1 = arith.constant 0 : i32
    return %c0_i32, %c0_i32_0 : i32, i32
  }
  func.func @transform_2(%arg0: i32) -> (i32, i32) {
    %c0_i32 = arith.constant 0 : i32
    %c0_i32_0 = arith.constant 0 : i32
    %c0_i32_1 = arith.constant 0 : i32
    return %c0_i32, %c0_i32_0 : i32, i32
  }
  func.func @transform_3(%arg0: i32) -> (i32, i32) {
    %c0_i32 = arith.constant 0 : i32
    %c0_i32_0 = arith.constant 0 : i32
    %c0_i32_1 = arith.constant 0 : i32
    return %c0_i32, %c0_i32_0 : i32, i32
  }
  func.func @transform_4(%arg0: i32) -> (i32, i32) {
    %c0_i32 = arith.constant 0 : i32
    %c0_i32_0 = arith.constant 0 : i32
    %c0_i32_1 = arith.constant 0 : i32
    return %c0_i32, %c0_i32_0 : i32, i32
  }
  func.func @transform_5(%arg0: i32) -> (i32, i32) {
    %c0_i32 = arith.constant 0 : i32
    %c0_i32_0 = arith.constant 0 : i32
    %c0_i32_1 = arith.constant 0 : i32
    return %c0_i32, %c0_i32_0 : i32, i32
  }
}

</mosaic_0001>

<llo_original>
// kernel: attention_forward.1
$region0: #{attention_forward.1}
  #allocation0 [shape = 'u32[]', space=smem, size = 0x4, offset = 0x4, fixed_abs, tag = 'smem constant byte address 0x4 - core index']
  #allocation1 [shape = 'u32[144,128]{1,0:T(1,128)}', space=vmem, size = 0x12000, scoped, tag = 'internal scratch']
  %s0 = inlined_call_operand.vmem [shape: f32[16,32], index: 0, kind: input, shape index: {}]
  %s1 = inlined_call_operand.vmem [shape: f32[32,128], index: 1, kind: input, shape index: {}]
  %s2 = inlined_call_operand.vmem [shape: f32[16,128], index: 2, kind: input, shape index: {}]
  %s3 = inlined_call_operand.vmem [shape: f32[16,128], index: 3, kind: input, shape index: {}]
  %s4 = inlined_call_operand.hbm [shape: f32[32,32], index: 4, kind: input, shape index: {}]
  %s5 = inlined_call_operand.hbm [shape: f32[16,32], index: 5, kind: output, shape index: {}]
  %s6 = sld [smem:[#allocation0]]
  $region34: #{attention_forward.1} parent=0
    _
  %s8 = ssub.s32 1, %s6
  %s9 = scalar_select 0, %s8, %s6
  $region1: #{attention_forward.1} parent=0
    #allocation2 [shape = 'u8[16384]{0}', space=vmem, size = 0x4000, scoped, tag = 'input window, operand 4, single buffered']
    #allocation3 [shape = 's32[1]{0}', space=sflag, size = 0x4, scoped, tag = 'scoped memory for attention_forward.1']
    #allocation4 [shape = 's32[1]{0}', space=sflag, size = 0x4, scoped, tag = 'scoped memory for attention_forward.1']
    #allocation5 [shape = 'u8[8192]{0}', space=vmem, size = 0x2000, scoped, tag = 'output window, operand 0, single buffered']
    %10 = vsyncpa [#allocation3], 0
    %11 = vsyncpa [#allocation4], 0
    // Predicated region
    $region2: #{attention_forward.1} parent=1 // pred_check
      _
    $region3: #{attention_forward.1} parent=1 // pred_check_branch
      %13 = sbr.rel (0) target = $region5
    $region4: #{attention_forward.1} parent=1 // pred_region
      _
    $region5: #{attention_forward.1} parent=1 // pred_fallthru
      _
    // Predicated region
    $region6: #{attention_forward.1} parent=1 // pred_check
      _
    $region7: #{attention_forward.1} parent=1 // pred_check_branch
      %15 = sbr.rel (0) target = $region9
    $region8: #{attention_forward.1} parent=1 // pred_region
      _
    $region9: #{attention_forward.1} parent=1 // pred_fallthru
      _
    // Predicated region
    $region10: #{attention_forward.1} parent=1 // pred_check
      _
    $region11: #{attention_forward.1} parent=1 // pred_check_branch
      %17 = sbr.rel (0) target = $region13
    $region12: #{attention_forward.1} parent=1 // pred_region
      _
    $region13: #{attention_forward.1} parent=1 // pred_fallthru
      _
    // Predicated region
    $region14: #{attention_forward.1} parent=1 // pred_check
      _
    $region15: #{attention_forward.1} parent=1 // pred_check_branch
      %19 = sbr.rel (0) target = $region17
    $region16: #{attention_forward.1} parent=1 // pred_region
      _
    $region17: #{attention_forward.1} parent=1 // pred_fallthru
      _
    // Predicated region
    $region18: #{attention_forward.1} parent=1 // pred_check
      _
    $region19: #{attention_forward.1} parent=1 // pred_check_branch
      %21 = sbr.rel (0) target = $region21
    $region20: #{attention_forward.1} parent=1 // pred_region
      %s23 = ssub.s32 512, 512
      %24 = vsyncadd [#allocation3], %s23
      %s25 = sshll.u32 [#allocation2], 4
      %s26 = int_to_ptr.vmem [resolvable:$true] %s25
      %31 = dma.hbm_to_vmem [thread:$0]  %s4, 512, %s26, [#allocation3], 128, 128, 8
    $region21: #{attention_forward.1} parent=1 // pred_fallthru
      _
    // Predicated region
    $region22: #{attention_forward.1} parent=1 // pred_check
      _
    $region23: #{attention_forward.1} parent=1 // pred_check_branch
      %33 = sbr.rel (0) target = $region25
    $region24: #{attention_forward.1} parent=1 // pred_region
      %34 = dma.done [#allocation3], 512
    $region25: #{attention_forward.1} parent=1 // pred_fallthru
      _
    %v35 = vld [vmem:[%s0] sm:$0xff]
    %v36 = vld [vmem:[%s0 + $0x8] sm:$0xff]
    %v37 = vld [vmem:[%s1] sm:$0xff]
    %v38 = vld [vmem:[%s1 + $0x8] sm:$0xff]
    %v39 = vld [vmem:[%s1 + $0x10] sm:$0xff]
    %v40 = vld [vmem:[%s1 + $0x18] sm:$0xff]
    %vm41 = vcmask 261120
    %v43 = vsel %vm41, %v35, 0
    %v46 = vsel %vm41, %v36, 0
    %48 = vmatprep.subr.mxu0 0.0
    %49 = vmatpush1.msra.mxu0 %v37
    %50 = vmatprep.subr.mxu0 0.0
    %51 = vmatpush1.msra.mxu0 %v38
    %52 = vmatprep.subr.mxu0 0.0
    %53 = vmatpush1.msra.mxu0 %v39
    %54 = vmatprep.subr.mxu0 0.0
    %55 = vmatpush1.msra.mxu0 %v40
    %56 = vmatprep.subr.mxu0 0.0
    %57 = vmatpush1.msra.mxu0 0.0
    %58 = vmatprep.subr.mxu0 0.0
    %59 = vmatpush1.msra.mxu0 0.0
    %60 = vmatprep.subr.mxu0 0.0
    %61 = vmatpush1.msra.mxu0 0.0
    %62 = vmatprep.subr.mxu0 0.0
    %63 = vmatpush1.msra.mxu0 0.0
    %64 = vmatprep.subr.mxu0 0.0
    %65 = vmatpush1.msra.mxu0 0.0
    %66 = vmatprep.subr.mxu0 0.0
    %67 = vmatpush1.msra.mxu0 0.0
    %68 = vmatprep.subr.mxu0 0.0
    %69 = vmatpush1.msra.mxu0 0.0
    %70 = vmatprep.subr.mxu0 0.0
    %71 = vmatpush1.msra.mxu0 0.0
    %72 = vmatprep.subr.mxu0 0.0
    %73 = vmatpush1.msra.mxu0 0.0
    %74 = vmatprep.subr.mxu0 0.0
    %75 = vmatpush1.msra.mxu0 0.0
    %76 = vmatprep.subr.mxu0 0.0
    %77 = vmatpush1.msra.mxu0 0.0
    %78 = vmatprep.subr.mxu0 0.0
    %79 = vmatpush1.msra.mxu0 0.0
    %80 = vmatprep.subr.mxu0 0.0
    %81 = vmatpush1.msra.mxu0 0.0
    %82 = vmatprep.subr.mxu0 0.0
    %83 = vmatpush1.msra.mxu0 0.0
    %84 = vmatprep.subr.mxu0 0.0
    %85 = vmatpush1.msra.mxu0 0.0
    %86 = vmatprep.subr.mxu0 0.0
    %87 = vmatpush1.msra.mxu0 0.0
    %88 = vmatprep.subr.mxu0 0.0
    %89 = vmatpush1.msra.mxu0 0.0
    %90 = vmatprep.subr.mxu0 0.0
    %91 = vmatpush1.msra.mxu0 0.0
    %92 = vmatprep.subr.mxu0 0.0
    %93 = vmatpush1.msra.mxu0 0.0
    %94 = vmatprep.subr.mxu0 0.0
    %95 = vmatpush1.msra.mxu0 0.0
    %96 = vmatprep.subr.mxu0 0.0
    %97 = vmatpush1.msra.mxu0 0.0
    %98 = vmatprep.subr.mxu0 0.0
    %99 = vmatpush1.msra.mxu0 0.0
    %100 = vmatprep.subr.mxu0 0.0
    %101 = vmatpush1.msra.mxu0 0.0
    %102 = vmatprep.subr.mxu0 0.0
    %103 = vmatpush1.msra.mxu0 0.0
    %104 = vmatprep.subr.mxu0 0.0
    %105 = vmatpush1.msra.mxu0 0.0
    %106 = vmatprep.subr.mxu0 0.0
    %107 = vmatpush1.msra.mxu0 0.0
    %108 = vmatprep.subr.mxu0 0.0
    %109 = vmatpush1.msra.mxu0 0.0
    %110 = vmatprep.subr.mxu0 0.0
    %111 = vmatpush1.msra.mxu0 0.0
    %112 = vmatprep.mubr.f32.mxu0 0.0
    %113 = vmatmul.mubr.f32.gmra.mrb[0].mxu0 %v43
    %v114 = vpop.f32.mrb[0].mxu0
    %v115 = vadd.f32 0.0, %v114
    %v116 = vpop.f32.mrb[0].mxu0
    %117 = vmatprep.mubr.f32.mxu0 0.0
    %118 = vmatmul.mubr.f32.gmra.mrb[0].mxu0 %v46
    %v119 = vpop.f32.mrb[0].mxu0
    %v120 = vadd.f32 0.0, %v119
    %v121 = vpop.f32.mrb[0].mxu0
    %122 = vdwg.mxu0
    %123 = vrot.lane.b32.xlu0 %v115, 64
    %v124 = vpop.permute.xlu0 %123
    %125 = vrot.lane.b32.xlu0 %v120, 64
    %v126 = vpop.permute.xlu0 %125
    %v127 = vld [vmem:[%s2] sm:$0xff]
    %v128 = vld [vmem:[%s2 + $0x8] sm:$0xff]
    %v129 = vmul.f32 %v115, %v127
    %v130 = vmul.f32 %v120, %v128
    %v131 = vld [vmem:[%s3] sm:$0xff]
    %v132 = vld [vmem:[%s3 + $0x8] sm:$0xff]
    %v133 = vmul.f32 %v124, %v131
    %v134 = vmul.f32 %v126, %v132
    %v135 = vadd.f32 %v129, %v133
    %v136 = vadd.f32 %v130, %v134
    %139 = vrot.lane.b32.xlu0 %v135, 120
    %v140 = vpop.permute.xlu0 %139
    %141 = vrot.lane.b32.xlu0 %v136, 120
    %v142 = vpop.permute.xlu0 %141
    %145 = vrot.lane.b32.xlu0 %v135, 112
    %v146 = vpop.permute.xlu0 %145
    %147 = vrot.lane.b32.xlu0 %v136, 112
    %v148 = vpop.permute.xlu0 %147
    %151 = vrot.lane.b32.xlu0 %v135, 104
    %v152 = vpop.permute.xlu0 %151
    %153 = vrot.lane.b32.xlu0 %v136, 104
    %v154 = vpop.permute.xlu0 %153
    %v157 = vcombine.low %v135, %v146
    %v158 = vcombine.high %v135, %v146
    %v160 = vunpack.c.l.s4 1983009808
    %v161 = vunpack.c.0.s8 %v160
    %v162 = vlaneseq
    %v163 = vshrl.u32 %v162, 7
    %v164 = vsub.s32 %v161, %v163
    %v165 = vrot.slane %v157, %v164
    %v167 = vunpack.c.l.s4 1983009808
    %v168 = vunpack.c.0.s8 %v167
    %v169 = vlaneseq
    %v170 = vshrl.u32 %v169, 7
    %v171 = vsub.s32 %v168, %v170
    %v172 = vrot.slane %v158, %v171
    %v173 = vcombine.low %v140, %v152
    %v174 = vcombine.high %v140, %v152
    %v176 = vunpack.c.l.s4 1983009808
    %v177 = vunpack.c.0.s8 %v176
    %v178 = vlaneseq
    %v179 = vshrl.u32 %v178, 7
    %v180 = vsub.s32 %v177, %v179
    %v181 = vrot.slane %v173, %v180
    %v183 = vunpack.c.l.s4 1983009808
    %v184 = vunpack.c.0.s8 %v183
    %v185 = vlaneseq
    %v186 = vshrl.u32 %v185, 7
    %v187 = vsub.s32 %v184, %v186
    %v188 = vrot.slane %v174, %v187
    %v189 = vcombine.low %v165, %v181
    %v190 = vcombine.high %v165, %v181
    %v192 = vunpack.c.l.s4 1934713408
    %v193 = vunpack.c.0.s8 %v192
    %v194 = vlaneseq
    %v195 = vshrl.u32 %v194, 7
    %v196 = vsub.s32 %v193, %v195
    %v197 = vrot.slane %v189, %v196
    %v199 = vunpack.c.l.s4 1934713408
    %v200 = vunpack.c.0.s8 %v199
    %v201 = vlaneseq
    %v202 = vshrl.u32 %v201, 7
    %v203 = vsub.s32 %v200, %v202
    %v204 = vrot.slane %v190, %v203
    %v205 = vcombine.low %v172, %v188
    %v206 = vcombine.high %v172, %v188
    %v208 = vunpack.c.l.s4 1934713408
    %v209 = vunpack.c.0.s8 %v208
    %v210 = vlaneseq
    %v211 = vshrl.u32 %v210, 7
    %v212 = vsub.s32 %v209, %v211
    %v213 = vrot.slane %v205, %v212
    %v215 = vunpack.c.l.s4 1934713408
    %v216 = vunpack.c.0.s8 %v215
    %v217 = vlaneseq
    %v218 = vshrl.u32 %v217, 7
    %v219 = vsub.s32 %v216, %v218
    %v220 = vrot.slane %v206, %v219
    %v221 = vcombine.high %v197, 0.0
    %v222 = vcombine.high %v204, 0.0
    %v223 = vcombine.high %v213, 0.0
    %v224 = vcombine.high %v220, 0.0
    %v225 = vcombine.low %v136, %v148
    %v226 = vcombine.high %v136, %v148
    %v228 = vunpack.c.l.s4 1983009808
    %v229 = vunpack.c.0.s8 %v228
    %v230 = vlaneseq
    %v231 = vshrl.u32 %v230, 7
    %v232 = vsub.s32 %v229, %v231
    %v233 = vrot.slane %v225, %v232
    %v235 = vunpack.c.l.s4 1983009808
    %v236 = vunpack.c.0.s8 %v235
    %v237 = vlaneseq
    %v238 = vshrl.u32 %v237, 7
    %v239 = vsub.s32 %v236, %v238
    %v240 = vrot.slane %v226, %v239
    %v241 = vcombine.low %v142, %v154
    %v242 = vcombine.high %v142, %v154
    %v244 = vunpack.c.l.s4 1983009808
    %v245 = vunpack.c.0.s8 %v244
    %v246 = vlaneseq
    %v247 = vshrl.u32 %v246, 7
    %v248 = vsub.s32 %v245, %v247
    %v249 = vrot.slane %v241, %v248
    %v251 = vunpack.c.l.s4 1983009808
    %v252 = vunpack.c.0.s8 %v251
    %v253 = vlaneseq
    %v254 = vshrl.u32 %v253, 7
    %v255 = vsub.s32 %v252, %v254
    %v256 = vrot.slane %v242, %v255
    %v257 = vcombine.low %v233, %v249
    %v258 = vcombine.high %v233, %v249
    %v260 = vunpack.c.l.s4 1934713408
    %v261 = vunpack.c.0.s8 %v260
    %v262 = vlaneseq
    %v263 = vshrl.u32 %v262, 7
    %v264 = vsub.s32 %v261, %v263
    %v265 = vrot.slane %v257, %v264
    %v267 = vunpack.c.l.s4 1934713408
    %v268 = vunpack.c.0.s8 %v267
    %v269 = vlaneseq
    %v270 = vshrl.u32 %v269, 7
    %v271 = vsub.s32 %v268, %v270
    %v272 = vrot.slane %v258, %v271
    %v273 = vcombine.low %v240, %v256
    %v274 = vcombine.high %v240, %v256
    %v276 = vunpack.c.l.s4 1934713408
    %v277 = vunpack.c.0.s8 %v276
    %v278 = vlaneseq
    %v279 = vshrl.u32 %v278, 7
    %v280 = vsub.s32 %v277, %v279
    %v281 = vrot.slane %v273, %v280
    %v283 = vunpack.c.l.s4 1934713408
    %v284 = vunpack.c.0.s8 %v283
    %v285 = vlaneseq
    %v286 = vshrl.u32 %v285, 7
    %v287 = vsub.s32 %v284, %v286
    %v288 = vrot.slane %v274, %v287
    %v289 = vcombine.high %v265, 0.0
    %v290 = vcombine.high %v272, 0.0
    %v291 = vcombine.high %v281, 0.0
    %v292 = vcombine.high %v288, 0.0
    %v293 = vcombine.low %v197, %v204
    %v295 = vunpack.c.l.s4 1983009808
    %v296 = vunpack.c.0.s8 %v295
    %v297 = vlaneseq
    %v298 = vshrl.u32 %v297, 7
    %v299 = vsub.s32 %v296, %v298
    %v300 = vrot.slane %v293, %v299
    %v301 = vcombine.low %v221, %v222
    %v303 = vunpack.c.l.s4 1983009808
    %v304 = vunpack.c.0.s8 %v303
    %v305 = vlaneseq
    %v306 = vshrl.u32 %v305, 7
    %v307 = vsub.s32 %v304, %v306
    %v308 = vrot.slane %v301, %v307
    %v309 = vcombine.low %v213, %v220
    %v311 = vunpack.c.l.s4 1983009808
    %v312 = vunpack.c.0.s8 %v311
    %v313 = vlaneseq
    %v314 = vshrl.u32 %v313, 7
    %v315 = vsub.s32 %v312, %v314
    %v316 = vrot.slane %v309, %v315
    %v317 = vcombine.low %v223, %v224
    %v319 = vunpack.c.l.s4 1983009808
    %v320 = vunpack.c.0.s8 %v319
    %v321 = vlaneseq
    %v322 = vshrl.u32 %v321, 7
    %v323 = vsub.s32 %v320, %v322
    %v324 = vrot.slane %v317, %v323
    %v325 = vcombine.low %v300, %v308
    %v326 = vcombine.high %v300, %v308
    %v328 = vunpack.c.l.s4 1934713408
    %v329 = vunpack.c.0.s8 %v328
    %v330 = vlaneseq
    %v331 = vshrl.u32 %v330, 7
    %v332 = vsub.s32 %v329, %v331
    %v333 = vrot.slane %v325, %v332
    %v335 = vunpack.c.l.s4 1934713408
    %v336 = vunpack.c.0.s8 %v335
    %v337 = vlaneseq
    %v338 = vshrl.u32 %v337, 7
    %v339 = vsub.s32 %v336, %v338
    %v340 = vrot.slane %v326, %v339
    %v341 = vcombine.low %v316, %v324
    %v342 = vcombine.high %v316, %v324
    %v344 = vunpack.c.l.s4 1934713408
    %v345 = vunpack.c.0.s8 %v344
    %v346 = vlaneseq
    %v347 = vshrl.u32 %v346, 7
    %v348 = vsub.s32 %v345, %v347
    %v349 = vrot.slane %v341, %v348
    %v351 = vunpack.c.l.s4 1934713408
    %v352 = vunpack.c.0.s8 %v351
    %v353 = vlaneseq
    %v354 = vshrl.u32 %v353, 7
    %v355 = vsub.s32 %v352, %v354
    %v356 = vrot.slane %v342, %v355
    %v357 = vcombine.low %v333, %v349
    %v358 = vcombine.high %v333, %v349
    %v359 = vcombine.low %v340, %v356
    %v360 = vcombine.high %v340, %v356
    %v361 = vcombine.low %v265, %v272
    %v363 = vunpack.c.l.s4 1983009808
    %v364 = vunpack.c.0.s8 %v363
    %v365 = vlaneseq
    %v366 = vshrl.u32 %v365, 7
    %v367 = vsub.s32 %v364, %v366
    %v368 = vrot.slane %v361, %v367
    %v369 = vcombine.low %v289, %v290
    %v371 = vunpack.c.l.s4 1983009808
    %v372 = vunpack.c.0.s8 %v371
    %v373 = vlaneseq
    %v374 = vshrl.u32 %v373, 7
    %v375 = vsub.s32 %v372, %v374
    %v376 = vrot.slane %v369, %v375
    %v377 = vcombine.low %v281, %v288
    %v379 = vunpack.c.l.s4 1983009808
    %v380 = vunpack.c.0.s8 %v379
    %v381 = vlaneseq
    %v382 = vshrl.u32 %v381, 7
    %v383 = vsub.s32 %v380, %v382
    %v384 = vrot.slane %v377, %v383
    %v385 = vcombine.low %v291, %v292
    %v387 = vunpack.c.l.s4 1983009808
    %v388 = vunpack.c.0.s8 %v387
    %v389 = vlaneseq
    %v390 = vshrl.u32 %v389, 7
    %v391 = vsub.s32 %v388, %v390
    %v392 = vrot.slane %v385, %v391
    %v393 = vcombine.low %v368, %v376
    %v394 = vcombine.high %v368, %v376
    %v396 = vunpack.c.l.s4 1934713408
    %v397 = vunpack.c.0.s8 %v396
    %v398 = vlaneseq
    %v399 = vshrl.u32 %v398, 7
    %v400 = vsub.s32 %v397, %v399
    %v401 = vrot.slane %v393, %v400
    %v403 = vunpack.c.l.s4 1934713408
    %v404 = vunpack.c.0.s8 %v403
    %v405 = vlaneseq
    %v406 = vshrl.u32 %v405, 7
    %v407 = vsub.s32 %v404, %v406
    %v408 = vrot.slane %v394, %v407
    %v409 = vcombine.low %v384, %v392
    %v410 = vcombine.high %v384, %v392
    %v412 = vunpack.c.l.s4 1934713408
    %v413 = vunpack.c.0.s8 %v412
    %v414 = vlaneseq
    %v415 = vshrl.u32 %v414, 7
    %v416 = vsub.s32 %v413, %v415
    %v417 = vrot.slane %v409, %v416
    %v419 = vunpack.c.l.s4 1934713408
    %v420 = vunpack.c.0.s8 %v419
    %v421 = vlaneseq
    %v422 = vshrl.u32 %v421, 7
    %v423 = vsub.s32 %v420, %v422
    %v424 = vrot.slane %v410, %v423
    %v425 = vcombine.low %v401, %v417
    %v426 = vcombine.high %v401, %v417
    %v427 = vcombine.low %v408, %v424
    %v428 = vcombine.high %v408, %v424
    %429 = vrot.lane.b32.xlu0 %v135, 96
    %v430 = vpop.permute.xlu0 %429
    %431 = vrot.lane.b32.xlu0 %v136, 96
    %v432 = vpop.permute.xlu0 %431
    %433 = vrot.lane.b32.xlu0 %v140, 96
    %v434 = vpop.permute.xlu0 %433
    %435 = vrot.lane.b32.xlu0 %v142, 96
    %v436 = vpop.permute.xlu0 %435
    %437 = vrot.lane.b32.xlu0 %v146, 96
    %v438 = vpop.permute.xlu0 %437
    %439 = vrot.lane.b32.xlu0 %v148, 96
    %v440 = vpop.permute.xlu0 %439
    %441 = vrot.lane.b32.xlu0 %v152, 96
    %v442 = vpop.permute.xlu0 %441
    %443 = vrot.lane.b32.xlu0 %v154, 96
    %v444 = vpop.permute.xlu0 %443
    %v453 = vcombine.low %v430, %v438
    %v454 = vcombine.high %v430, %v438
    %v456 = vunpack.c.l.s4 1983009808
    %v457 = vunpack.c.0.s8 %v456
    %v458 = vlaneseq
    %v459 = vshrl.u32 %v458, 7
    %v460 = vsub.s32 %v457, %v459
    %v461 = vrot.slane %v453, %v460
    %v463 = vunpack.c.l.s4 1983009808
    %v464 = vunpack.c.0.s8 %v463
    %v465 = vlaneseq
    %v466 = vshrl.u32 %v465, 7
    %v467 = vsub.s32 %v464, %v466
    %v468 = vrot.slane %v454, %v467
    %v469 = vcombine.low %v434, %v442
    %v470 = vcombine.high %v434, %v442
    %v472 = vunpack.c.l.s4 1983009808
    %v473 = vunpack.c.0.s8 %v472
    %v474 = vlaneseq
    %v475 = vshrl.u32 %v474, 7
    %v476 = vsub.s32 %v473, %v475
    %v477 = vrot.slane %v469, %v476
    %v479 = vunpack.c.l.s4 1983009808
    %v480 = vunpack.c.0.s8 %v479
    %v481 = vlaneseq
    %v482 = vshrl.u32 %v481, 7
    %v483 = vsub.s32 %v480, %v482
    %v484 = vrot.slane %v470, %v483
    %v485 = vcombine.low %v461, %v477
    %v486 = vcombine.high %v461, %v477
    %v488 = vunpack.c.l.s4 1934713408
    %v489 = vunpack.c.0.s8 %v488
    %v490 = vlaneseq
    %v491 = vshrl.u32 %v490, 7
    %v492 = vsub.s32 %v489, %v491
    %v493 = vrot.slane %v485, %v492
    %v495 = vunpack.c.l.s4 1934713408
    %v496 = vunpack.c.0.s8 %v495
    %v497 = vlaneseq
    %v498 = vshrl.u32 %v497, 7
    %v499 = vsub.s32 %v496, %v498
    %v500 = vrot.slane %v486, %v499
    %v501 = vcombine.low %v468, %v484
    %v502 = vcombine.high %v468, %v484
    %v504 = vunpack.c.l.s4 1934713408
    %v505 = vunpack.c.0.s8 %v504
    %v506 = vlaneseq
    %v507 = vshrl.u32 %v506, 7
    %v508 = vsub.s32 %v505, %v507
    %v509 = vrot.slane %v501, %v508
    %v511 = vunpack.c.l.s4 1934713408
    %v512 = vunpack.c.0.s8 %v511
    %v513 = vlaneseq
    %v514 = vshrl.u32 %v513, 7
    %v515 = vsub.s32 %v512, %v514
    %v516 = vrot.slane %v502, %v515
    %v517 = vcombine.high %v493, 0.0
    %v518 = vcombine.high %v500, 0.0
    %v519 = vcombine.high %v509, 0.0
    %v520 = vcombine.high %v516, 0.0
    %v521 = vcombine.low %v432, %v440
    %v522 = vcombine.high %v432, %v440
    %v524 = vunpack.c.l.s4 1983009808
    %v525 = vunpack.c.0.s8 %v524
    %v526 = vlaneseq
    %v527 = vshrl.u32 %v526, 7
    %v528 = vsub.s32 %v525, %v527
    %v529 = vrot.slane %v521, %v528
    %v531 = vunpack.c.l.s4 1983009808
    %v532 = vunpack.c.0.s8 %v531
    %v533 = vlaneseq
    %v534 = vshrl.u32 %v533, 7
    %v535 = vsub.s32 %v532, %v534
    %v536 = vrot.slane %v522, %v535
    %v537 = vcombine.low %v436, %v444
    %v538 = vcombine.high %v436, %v444
    %v540 = vunpack.c.l.s4 1983009808
    %v541 = vunpack.c.0.s8 %v540
    %v542 = vlaneseq
    %v543 = vshrl.u32 %v542, 7
    %v544 = vsub.s32 %v541, %v543
    %v545 = vrot.slane %v537, %v544
    %v547 = vunpack.c.l.s4 1983009808
    %v548 = vunpack.c.0.s8 %v547
    %v549 = vlaneseq
    %v550 = vshrl.u32 %v549, 7
    %v551 = vsub.s32 %v548, %v550
    %v552 = vrot.slane %v538, %v551
    %v553 = vcombine.low %v529, %v545
    %v554 = vcombine.high %v529, %v545
    %v556 = vunpack.c.l.s4 1934713408
    %v557 = vunpack.c.0.s8 %v556
    %v558 = vlaneseq
    %v559 = vshrl.u32 %v558, 7
    %v560 = vsub.s32 %v557, %v559
    %v561 = vrot.slane %v553, %v560
    %v563 = vunpack.c.l.s4 1934713408
    %v564 = vunpack.c.0.s8 %v563
    %v565 = vlaneseq
    %v566 = vshrl.u32 %v565, 7
    %v567 = vsub.s32 %v564, %v566
    %v568 = vrot.slane %v554, %v567
    %v569 = vcombine.low %v536, %v552
    %v570 = vcombine.high %v536, %v552
    %v572 = vunpack.c.l.s4 1934713408
    %v573 = vunpack.c.0.s8 %v572
    %v574 = vlaneseq
    %v575 = vshrl.u32 %v574, 7
    %v576 = vsub.s32 %v573, %v575
    %v577 = vrot.slane %v569, %v576
    %v579 = vunpack.c.l.s4 1934713408
    %v580 = vunpack.c.0.s8 %v579
    %v581 = vlaneseq
    %v582 = vshrl.u32 %v581, 7
    %v583 = vsub.s32 %v580, %v582
    %v584 = vrot.slane %v570, %v583
    %v585 = vcombine.high %v561, 0.0
    %v586 = vcombine.high %v568, 0.0
    %v587 = vcombine.high %v577, 0.0
    %v588 = vcombine.high %v584, 0.0
    %v589 = vcombine.low %v493, %v500
    %v591 = vunpack.c.l.s4 1983009808
    %v592 = vunpack.c.0.s8 %v591
    %v593 = vlaneseq
    %v594 = vshrl.u32 %v593, 7
    %v595 = vsub.s32 %v592, %v594
    %v596 = vrot.slane %v589, %v595
    %v597 = vcombine.low %v517, %v518
    %v599 = vunpack.c.l.s4 1983009808
    %v600 = vunpack.c.0.s8 %v599
    %v601 = vlaneseq
    %v602 = vshrl.u32 %v601, 7
    %v603 = vsub.s32 %v600, %v602
    %v604 = vrot.slane %v597, %v603
    %v605 = vcombine.low %v509, %v516
    %v607 = vunpack.c.l.s4 1983009808
    %v608 = vunpack.c.0.s8 %v607
    %v609 = vlaneseq
    %v610 = vshrl.u32 %v609, 7
    %v611 = vsub.s32 %v608, %v610
    %v612 = vrot.slane %v605, %v611
    %v613 = vcombine.low %v519, %v520
    %v615 = vunpack.c.l.s4 1983009808
    %v616 = vunpack.c.0.s8 %v615
    %v617 = vlaneseq
    %v618 = vshrl.u32 %v617, 7
    %v619 = vsub.s32 %v616, %v618
    %v620 = vrot.slane %v613, %v619
    %v621 = vcombine.low %v596, %v604
    %v622 = vcombine.high %v596, %v604
    %v624 = vunpack.c.l.s4 1934713408
    %v625 = vunpack.c.0.s8 %v624
    %v626 = vlaneseq
    %v627 = vshrl.u32 %v626, 7
    %v628 = vsub.s32 %v625, %v627
    %v629 = vrot.slane %v621, %v628
    %v631 = vunpack.c.l.s4 1934713408
    %v632 = vunpack.c.0.s8 %v631
    %v633 = vlaneseq
    %v634 = vshrl.u32 %v633, 7
    %v635 = vsub.s32 %v632, %v634
    %v636 = vrot.slane %v622, %v635
    %v637 = vcombine.low %v612, %v620
    %v638 = vcombine.high %v612, %v620
    %v640 = vunpack.c.l.s4 1934713408
    %v641 = vunpack.c.0.s8 %v640
    %v642 = vlaneseq
    %v643 = vshrl.u32 %v642, 7
    %v644 = vsub.s32 %v641, %v643
    %v645 = vrot.slane %v637, %v644
    %v647 = vunpack.c.l.s4 1934713408
    %v648 = vunpack.c.0.s8 %v647
    %v649 = vlaneseq
    %v650 = vshrl.u32 %v649, 7
    %v651 = vsub.s32 %v648, %v650
    %v652 = vrot.slane %v638, %v651
    %v653 = vcombine.low %v629, %v645
    %v654 = vcombine.high %v629, %v645
    %v655 = vcombine.low %v636, %v652
    %v656 = vcombine.high %v636, %v652
    %v657 = vcombine.low %v561, %v568
    %v659 = vunpack.c.l.s4 1983009808
    %v660 = vunpack.c.0.s8 %v659
    %v661 = vlaneseq
    %v662 = vshrl.u32 %v661, 7
    %v663 = vsub.s32 %v660, %v662
    %v664 = vrot.slane %v657, %v663
    %v665 = vcombine.low %v585, %v586
    %v667 = vunpack.c.l.s4 1983009808
    %v668 = vunpack.c.0.s8 %v667
    %v669 = vlaneseq
    %v670 = vshrl.u32 %v669, 7
    %v671 = vsub.s32 %v668, %v670
    %v672 = vrot.slane %v665, %v671
    %v673 = vcombine.low %v577, %v584
    %v675 = vunpack.c.l.s4 1983009808
    %v676 = vunpack.c.0.s8 %v675
    %v677 = vlaneseq
    %v678 = vshrl.u32 %v677, 7
    %v679 = vsub.s32 %v676, %v678
    %v680 = vrot.slane %v673, %v679
    %v681 = vcombine.low %v587, %v588
    %v683 = vunpack.c.l.s4 1983009808
    %v684 = vunpack.c.0.s8 %v683
    %v685 = vlaneseq
    %v686 = vshrl.u32 %v685, 7
    %v687 = vsub.s32 %v684, %v686
    %v688 = vrot.slane %v681, %v687
    %v689 = vcombine.low %v664, %v672
    %v690 = vcombine.high %v664, %v672
    %v692 = vunpack.c.l.s4 1934713408
    %v693 = vunpack.c.0.s8 %v692
    %v694 = vlaneseq
    %v695 = vshrl.u32 %v694, 7
    %v696 = vsub.s32 %v693, %v695
    %v697 = vrot.slane %v689, %v696
    %v699 = vunpack.c.l.s4 1934713408
    %v700 = vunpack.c.0.s8 %v699
    %v701 = vlaneseq
    %v702 = vshrl.u32 %v701, 7
    %v703 = vsub.s32 %v700, %v702
    %v704 = vrot.slane %v690, %v703
    %v705 = vcombine.low %v680, %v688
    %v706 = vcombine.high %v680, %v688
    %v708 = vunpack.c.l.s4 1934713408
    %v709 = vunpack.c.0.s8 %v708
    %v710 = vlaneseq
    %v711 = vshrl.u32 %v710, 7
    %v712 = vsub.s32 %v709, %v711
    %v713 = vrot.slane %v705, %v712
    %v715 = vunpack.c.l.s4 1934713408
    %v716 = vunpack.c.0.s8 %v715
    %v717 = vlaneseq
    %v718 = vshrl.u32 %v717, 7
    %v719 = vsub.s32 %v716, %v718
    %v720 = vrot.slane %v706, %v719
    %v721 = vcombine.low %v697, %v713
    %v722 = vcombine.high %v697, %v713
    %v723 = vcombine.low %v704, %v720
    %v724 = vcombine.high %v704, %v720
    %v725 = vlaneseq
    %v726 = vshrl.u32 %v725, 7
    %v727 = vlaneseq
    %v728 = vand.u32 %v727, 127
    %vm729 = vcmp.gt.s32.totalorder %v728, %v726
    %v730 = vsel %vm729, -1e+30, 0.0
    %vm731 = vcmask 64512
    %v733 = vsel %vm731, %v357, 0
    %v736 = vsel %vm731, %v358, 0
    %v739 = vsel %vm731, %v653, 0
    %741 = vmatprep.subr.mxu0 0.0
    %742 = vmatpush1.xpose.msra.mxu0 %v739
    %743 = vmatprep.subr.mxu0 0.0
    %744 = vmatpush1.xpose.msra.mxu0 0.0
    %745 = vmatprep.subr.mxu0 0.0
    %746 = vmatpush1.xpose.msra.mxu0 0.0
    %747 = vmatprep.subr.mxu0 0.0
    %748 = vmatpush1.xpose.msra.mxu0 0.0
    %749 = vmatprep.subr.mxu0 0.0
    %750 = vmatpush1.xpose.msra.mxu0 0.0
    %751 = vmatprep.subr.mxu0 0.0
    %752 = vmatpush1.xpose.msra.mxu0 0.0
    %753 = vmatprep.subr.mxu0 0.0
    %754 = vmatpush1.xpose.msra.mxu0 0.0
    %755 = vmatprep.subr.mxu0 0.0
    %756 = vmatpush1.xpose.msra.mxu0 0.0
    %757 = vmatprep.subr.mxu0 0.0
    %758 = vmatpush1.xpose.msra.mxu0 0.0
    %759 = vmatprep.subr.mxu0 0.0
    %760 = vmatpush1.xpose.msra.mxu0 0.0
    %761 = vmatprep.subr.mxu0 0.0
    %762 = vmatpush1.xpose.msra.mxu0 0.0
    %763 = vmatprep.subr.mxu0 0.0
    %764 = vmatpush1.xpose.msra.mxu0 0.0
    %765 = vmatprep.subr.mxu0 0.0
    %766 = vmatpush1.xpose.msra.mxu0 0.0
    %767 = vmatprep.subr.mxu0 0.0
    %768 = vmatpush1.xpose.msra.mxu0 0.0
    %769 = vmatprep.subr.mxu0 0.0
    %770 = vmatpush1.xpose.msra.mxu0 0.0
    %771 = vmatprep.subr.mxu0 0.0
    %772 = vmatpush1.xpose.msra.mxu0 0.0
    %773 = vmatprep.subr.mxu0 0.0
    %774 = vmatpush1.xpose.msra.mxu0 0.0
    %775 = vmatprep.subr.mxu0 0.0
    %776 = vmatpush1.xpose.msra.mxu0 0.0
    %777 = vmatprep.subr.mxu0 0.0
    %778 = vmatpush1.xpose.msra.mxu0 0.0
    %779 = vmatprep.subr.mxu0 0.0
    %780 = vmatpush1.xpose.msra.mxu0 0.0
    %781 = vmatprep.subr.mxu0 0.0
    %782 = vmatpush1.xpose.msra.mxu0 0.0
    %783 = vmatprep.subr.mxu0 0.0
    %784 = vmatpush1.xpose.msra.mxu0 0.0
    %785 = vmatprep.subr.mxu0 0.0
    %786 = vmatpush1.xpose.msra.mxu0 0.0
    %787 = vmatprep.subr.mxu0 0.0
    %788 = vmatpush1.xpose.msra.mxu0 0.0
    %789 = vmatprep.subr.mxu0 0.0
    %790 = vmatpush1.xpose.msra.mxu0 0.0
    %791 = vmatprep.subr.mxu0 0.0
    %792 = vmatpush1.xpose.msra.mxu0 0.0
    %793 = vmatprep.subr.mxu0 0.0
    %794 = vmatpush1.xpose.msra.mxu0 0.0
    %795 = vmatprep.subr.mxu0 0.0
    %796 = vmatpush1.xpose.msra.mxu0 0.0
    %797 = vmatprep.subr.mxu0 0.0
    %798 = vmatpush1.xpose.msra.mxu0 0.0
    %799 = vmatprep.subr.mxu0 0.0
    %800 = vmatpush1.xpose.msra.mxu0 0.0
    %801 = vmatprep.subr.mxu0 0.0
    %802 = vmatpush1.xpose.msra.mxu0 0.0
    %803 = vmatprep.subr.mxu0 0.0
    %804 = vmatpush1.xpose.msra.mxu0 0.0
    %805 = vmatprep.mubr.f32.mxu0 0.0
    %806 = vmatmul.mubr.f32.gmra.mrb[0].mxu0 %v733
    %v807 = vpop.f32.mrb[0].mxu0
    %v808 = vadd.f32 %v730, %v807
    %v809 = vpop.f32.mrb[0].mxu0
    %810 = vmatprep.mubr.f32.mxu0 0.0
    %811 = vmatmul.mubr.f32.gmra.mrb[0].mxu0 %v736
    %v812 = vpop.f32.mrb[0].mxu0
    %v813 = vadd.f32 %v730, %v812
    %v814 = vpop.f32.mrb[0].mxu0
    %815 = vdwg.mxu0
    %v817 = vsel %vm731, %v359, 0
    %v820 = vsel %vm731, %v360, 0
    %v823 = vsel %vm731, %v654, 0
    %825 = vmatprep.subr.mxu0 0.0
    %826 = vmatpush1.xpose.msra.mxu0 %v823
    %827 = vmatprep.subr.mxu0 0.0
    %828 = vmatpush1.xpose.msra.mxu0 0.0
    %829 = vmatprep.subr.mxu0 0.0
    %830 = vmatpush1.xpose.msra.mxu0 0.0
    %831 = vmatprep.subr.mxu0 0.0
    %832 = vmatpush1.xpose.msra.mxu0 0.0
    %833 = vmatprep.subr.mxu0 0.0
    %834 = vmatpush1.xpose.msra.mxu0 0.0
    %835 = vmatprep.subr.mxu0 0.0
    %836 = vmatpush1.xpose.msra.mxu0 0.0
    %837 = vmatprep.subr.mxu0 0.0
    %838 = vmatpush1.xpose.msra.mxu0 0.0
    %839 = vmatprep.subr.mxu0 0.0
    %840 = vmatpush1.xpose.msra.mxu0 0.0
    %841 = vmatprep.subr.mxu0 0.0
    %842 = vmatpush1.xpose.msra.mxu0 0.0
    %843 = vmatprep.subr.mxu0 0.0
    %844 = vmatpush1.xpose.msra.mxu0 0.0
    %845 = vmatprep.subr.mxu0 0.0
    %846 = vmatpush1.xpose.msra.mxu0 0.0
    %847 = vmatprep.subr.mxu0 0.0
    %848 = vmatpush1.xpose.msra.mxu0 0.0
    %849 = vmatprep.subr.mxu0 0.0
    %850 = vmatpush1.xpose.msra.mxu0 0.0
    %851 = vmatprep.subr.mxu0 0.0
    %852 = vmatpush1.xpose.msra.mxu0 0.0
    %853 = vmatprep.subr.mxu0 0.0
    %854 = vmatpush1.xpose.msra.mxu0 0.0
    %855 = vmatprep.subr.mxu0 0.0
    %856 = vmatpush1.xpose.msra.mxu0 0.0
    %857 = vmatprep.subr.mxu0 0.0
    %858 = vmatpush1.xpose.msra.mxu0 0.0
    %859 = vmatprep.subr.mxu0 0.0
    %860 = vmatpush1.xpose.msra.mxu0 0.0
    %861 = vmatprep.subr.mxu0 0.0
    %862 = vmatpush1.xpose.msra.mxu0 0.0
    %863 = vmatprep.subr.mxu0 0.0
    %864 = vmatpush1.xpose.msra.mxu0 0.0
    %865 = vmatprep.subr.mxu0 0.0
    %866 = vmatpush1.xpose.msra.mxu0 0.0
    %867 = vmatprep.subr.mxu0 0.0
    %868 = vmatpush1.xpose.msra.mxu0 0.0
    %869 = vmatprep.subr.mxu0 0.0
    %870 = vmatpush1.xpose.msra.mxu0 0.0
    %871 = vmatprep.subr.mxu0 0.0
    %872 = vmatpush1.xpose.msra.mxu0 0.0
    %873 = vmatprep.subr.mxu0 0.0
    %874 = vmatpush1.xpose.msra.mxu0 0.0
    %875 = vmatprep.subr.mxu0 0.0
    %876 = vmatpush1.xpose.msra.mxu0 0.0
    %877 = vmatprep.subr.mxu0 0.0
    %878 = vmatpush1.xpose.msra.mxu0 0.0
    %879 = vmatprep.subr.mxu0 0.0
    %880 = vmatpush1.xpose.msra.mxu0 0.0
    %881 = vmatprep.subr.mxu0 0.0
    %882 = vmatpush1.xpose.msra.mxu0 0.0
    %883 = vmatprep.subr.mxu0 0.0
    %884 = vmatpush1.xpose.msra.mxu0 0.0
    %885 = vmatprep.subr.mxu0 0.0
    %886 = vmatpush1.xpose.msra.mxu0 0.0
    %887 = vmatprep.subr.mxu0 0.0
    %888 = vmatpush1.xpose.msra.mxu0 0.0
    %889 = vmatprep.mubr.f32.mxu0 0.0
    %890 = vmatmul.mubr.f32.gmra.mrb[0].mxu0 %v817
    %v891 = vpop.f32.mrb[0].mxu0
    %v892 = vadd.f32 %v730, %v891
    %v893 = vpop.f32.mrb[0].mxu0
    %894 = vmatprep.mubr.f32.mxu0 0.0
    %895 = vmatmul.mubr.f32.gmra.mrb[0].mxu0 %v820
    %v896 = vpop.f32.mrb[0].mxu0
    %v897 = vadd.f32 %v730, %v896
    %v898 = vpop.f32.mrb[0].mxu0
    %899 = vdwg.mxu0
    %v901 = vsel %vm731, %v425, 0
    %v904 = vsel %vm731, %v426, 0
    %v907 = vsel %vm731, %v721, 0
    %909 = vmatprep.subr.mxu0 0.0
    %910 = vmatpush1.xpose.msra.mxu0 %v907
    %911 = vmatprep.subr.mxu0 0.0
    %912 = vmatpush1.xpose.msra.mxu0 0.0
    %913 = vmatprep.subr.mxu0 0.0
    %914 = vmatpush1.xpose.msra.mxu0 0.0
    %915 = vmatprep.subr.mxu0 0.0
    %916 = vmatpush1.xpose.msra.mxu0 0.0
    %917 = vmatprep.subr.mxu0 0.0
    %918 = vmatpush1.xpose.msra.mxu0 0.0
    %919 = vmatprep.subr.mxu0 0.0
    %920 = vmatpush1.xpose.msra.mxu0 0.0
    %921 = vmatprep.subr.mxu0 0.0
    %922 = vmatpush1.xpose.msra.mxu0 0.0
    %923 = vmatprep.subr.mxu0 0.0
    %924 = vmatpush1.xpose.msra.mxu0 0.0
    %925 = vmatprep.subr.mxu0 0.0
    %926 = vmatpush1.xpose.msra.mxu0 0.0
    %927 = vmatprep.subr.mxu0 0.0
    %928 = vmatpush1.xpose.msra.mxu0 0.0
    %929 = vmatprep.subr.mxu0 0.0
    %930 = vmatpush1.xpose.msra.mxu0 0.0
    %931 = vmatprep.subr.mxu0 0.0
    %932 = vmatpush1.xpose.msra.mxu0 0.0
    %933 = vmatprep.subr.mxu0 0.0
    %934 = vmatpush1.xpose.msra.mxu0 0.0
    %935 = vmatprep.subr.mxu0 0.0
    %936 = vmatpush1.xpose.msra.mxu0 0.0
    %937 = vmatprep.subr.mxu0 0.0
    %938 = vmatpush1.xpose.msra.mxu0 0.0
    %939 = vmatprep.subr.mxu0 0.0
    %940 = vmatpush1.xpose.msra.mxu0 0.0
    %941 = vmatprep.subr.mxu0 0.0
    %942 = vmatpush1.xpose.msra.mxu0 0.0
    %943 = vmatprep.subr.mxu0 0.0
    %944 = vmatpush1.xpose.msra.mxu0 0.0
    %945 = vmatprep.subr.mxu0 0.0
    %946 = vmatpush1.xpose.msra.mxu0 0.0
    %947 = vmatprep.subr.mxu0 0.0
    %948 = vmatpush1.xpose.msra.mxu0 0.0
    %949 = vmatprep.subr.mxu0 0.0
    %950 = vmatpush1.xpose.msra.mxu0 0.0
    %951 = vmatprep.subr.mxu0 0.0
    %952 = vmatpush1.xpose.msra.mxu0 0.0
    %953 = vmatprep.subr.mxu0 0.0
    %954 = vmatpush1.xpose.msra.mxu0 0.0
    %955 = vmatprep.subr.mxu0 0.0
    %956 = vmatpush1.xpose.msra.mxu0 0.0
    %957 = vmatprep.subr.mxu0 0.0
    %958 = vmatpush1.xpose.msra.mxu0 0.0
    %959 = vmatprep.subr.mxu0 0.0
    %960 = vmatpush1.xpose.msra.mxu0 0.0
    %961 = vmatprep.subr.mxu0 0.0
    %962 = vmatpush1.xpose.msra.mxu0 0.0
    %963 = vmatprep.subr.mxu0 0.0
    %964 = vmatpush1.xpose.msra.mxu0 0.0
    %965 = vmatprep.subr.mxu0 0.0
    %966 = vmatpush1.xpose.msra.mxu0 0.0
    %967 = vmatprep.subr.mxu0 0.0
    %968 = vmatpush1.xpose.msra.mxu0 0.0
    %969 = vmatprep.subr.mxu0 0.0
    %970 = vmatpush1.xpose.msra.mxu0 0.0
    %971 = vmatprep.subr.mxu0 0.0
    %972 = vmatpush1.xpose.msra.mxu0 0.0
    %973 = vmatprep.mubr.f32.mxu0 0.0
    %974 = vmatmul.mubr.f32.gmra.mrb[0].mxu0 %v901
    %v975 = vpop.f32.mrb[0].mxu0
    %v976 = vadd.f32 %v730, %v975
    %v977 = vpop.f32.mrb[0].mxu0
    %978 = vmatprep.mubr.f32.mxu0 0.0
    %979 = vmatmul.mubr.f32.gmra.mrb[0].mxu0 %v904
    %v980 = vpop.f32.mrb[0].mxu0
    %v981 = vadd.f32 %v730, %v980
    %v982 = vpop.f32.mrb[0].mxu0
    %983 = vdwg.mxu0
    %v985 = vsel %vm731, %v427, 0
    %v988 = vsel %vm731, %v428, 0
    %v991 = vsel %vm731, %v722, 0
    %993 = vmatprep.subr.mxu0 0.0
    %994 = vmatpush1.xpose.msra.mxu0 %v991
    %995 = vmatprep.subr.mxu0 0.0
    %996 = vmatpush1.xpose.msra.mxu0 0.0
    %997 = vmatprep.subr.mxu0 0.0
    %998 = vmatpush1.xpose.msra.mxu0 0.0
    %999 = vmatprep.subr.mxu0 0.0
    %1000 = vmatpush1.xpose.msra.mxu0 0.0
    %1001 = vmatprep.subr.mxu0 0.0
    %1002 = vmatpush1.xpose.msra.mxu0 0.0
    %1003 = vmatprep.subr.mxu0 0.0
    %1004 = vmatpush1.xpose.msra.mxu0 0.0
    %1005 = vmatprep.subr.mxu0 0.0
    %1006 = vmatpush1.xpose.msra.mxu0 0.0
    %1007 = vmatprep.subr.mxu0 0.0
    %1008 = vmatpush1.xpose.msra.mxu0 0.0
    %1009 = vmatprep.subr.mxu0 0.0
    %1010 = vmatpush1.xpose.msra.mxu0 0.0
    %1011 = vmatprep.subr.mxu0 0.0
    %1012 = vmatpush1.xpose.msra.mxu0 0.0
    %1013 = vmatprep.subr.mxu0 0.0
    %1014 = vmatpush1.xpose.msra.mxu0 0.0
    %1015 = vmatprep.subr.mxu0 0.0
    %1016 = vmatpush1.xpose.msra.mxu0 0.0
    %1017 = vmatprep.subr.mxu0 0.0
    %1018 = vmatpush1.xpose.msra.mxu0 0.0
    %1019 = vmatprep.subr.mxu0 0.0
    %1020 = vmatpush1.xpose.msra.mxu0 0.0
    %1021 = vmatprep.subr.mxu0 0.0
    %1022 = vmatpush1.xpose.msra.mxu0 0.0
    %1023 = vmatprep.subr.mxu0 0.0
    %1024 = vmatpush1.xpose.msra.mxu0 0.0
    %1025 = vmatprep.subr.mxu0 0.0
    %1026 = vmatpush1.xpose.msra.mxu0 0.0
    %1027 = vmatprep.subr.mxu0 0.0
    %1028 = vmatpush1.xpose.msra.mxu0 0.0
    %1029 = vmatprep.subr.mxu0 0.0
    %1030 = vmatpush1.xpose.msra.mxu0 0.0
    %1031 = vmatprep.subr.mxu0 0.0
    %1032 = vmatpush1.xpose.msra.mxu0 0.0
    %1033 = vmatprep.subr.mxu0 0.0
    %1034 = vmatpush1.xpose.msra.mxu0 0.0
    %1035 = vmatprep.subr.mxu0 0.0
    %1036 = vmatpush1.xpose.msra.mxu0 0.0
    %1037 = vmatprep.subr.mxu0 0.0
    %1038 = vmatpush1.xpose.msra.mxu0 0.0
    %1039 = vmatprep.subr.mxu0 0.0
    %1040 = vmatpush1.xpose.msra.mxu0 0.0
    %1041 = vmatprep.subr.mxu0 0.0
    %1042 = vmatpush1.xpose.msra.mxu0 0.0
    %1043 = vmatprep.subr.mxu0 0.0
    %1044 = vmatpush1.xpose.msra.mxu0 0.0
    %1045 = vmatprep.subr.mxu0 0.0
    %1046 = vmatpush1.xpose.msra.mxu0 0.0
    %1047 = vmatprep.subr.mxu0 0.0
    %1048 = vmatpush1.xpose.msra.mxu0 0.0
    %1049 = vmatprep.subr.mxu0 0.0
    %1050 = vmatpush1.xpose.msra.mxu0 0.0
    %1051 = vmatprep.subr.mxu0 0.0
    %1052 = vmatpush1.xpose.msra.mxu0 0.0
    %1053 = vmatprep.subr.mxu0 0.0
    %1054 = vmatpush1.xpose.msra.mxu0 0.0
    %1055 = vmatprep.subr.mxu0 0.0
    %1056 = vmatpush1.xpose.msra.mxu0 0.0
    %1057 = vmatprep.mubr.f32.mxu0 0.0
    %1058 = vmatmul.mubr.f32.gmra.mrb[0].mxu0 %v985
    %v1059 = vpop.f32.mrb[0].mxu0
    %v1060 = vadd.f32 %v730, %v1059
    %v1061 = vpop.f32.mrb[0].mxu0
    %1062 = vmatprep.mubr.f32.mxu0 0.0
    %1063 = vmatmul.mubr.f32.gmra.mrb[0].mxu0 %v988
    %v1064 = vpop.f32.mrb[0].mxu0
    %v1065 = vadd.f32 %v730, %v1064
    %v1066 = vpop.f32.mrb[0].mxu0
    %1067 = vdwg.mxu0
    %v1068 = vsel %vm731, %v808, -inf
    %1069 = vmax.xlane.f32.xlu0 %v1068
    %v1070 = vpop.xlane.xlu0 %1069
    %v1071 = vsel %vm731, %v813, -inf
    %1072 = vmax.xlane.f32.xlu0 %v1071
    %v1073 = vpop.xlane.xlu0 %1072
    %v1074 = vsel %vm731, %v892, -inf
    %1075 = vmax.xlane.f32.xlu0 %v1074
    %v1076 = vpop.xlane.xlu0 %1075
    %v1077 = vsel %vm731, %v897, -inf
    %1078 = vmax.xlane.f32.xlu0 %v1077
    %v1079 = vpop.xlane.xlu0 %1078
    %v1080 = vsel %vm731, %v976, -inf
    %1081 = vmax.xlane.f32.xlu0 %v1080
    %v1082 = vpop.xlane.xlu0 %1081
    %v1083 = vsel %vm731, %v981, -inf
    %1084 = vmax.xlane.f32.xlu0 %v1083
    %v1085 = vpop.xlane.xlu0 %1084
    %v1086 = vsel %vm731, %v1060, -inf
    %1087 = vmax.xlane.f32.xlu0 %v1086
    %v1088 = vpop.xlane.xlu0 %1087
    %v1089 = vsel %vm731, %v1065, -inf
    %1090 = vmax.xlane.f32.xlu0 %v1089
    %v1091 = vpop.xlane.xlu0 %1090
    %v1092 = vsub.f32 %v808, %v1070
    %v1093 = vsub.f32 %v813, %v1073
    %v1094 = vsub.f32 %v892, %v1076
    %v1095 = vsub.f32 %v897, %v1079
    %v1096 = vsub.f32 %v976, %v1082
    %v1097 = vsub.f32 %v981, %v1085
    %v1098 = vsub.f32 %v1060, %v1088
    %v1099 = vsub.f32 %v1065, %v1091
    %v1100 = vmul.f32 %v1092, 1.442695
    %v1101 = vpow.pop %v1100
    %v1102 = vmul.f32 %v1093, 1.442695
    %v1103 = vpow.pop %v1102
    %v1104 = vmul.f32 %v1094, 1.442695
    %v1105 = vpow.pop %v1104
    %v1106 = vmul.f32 %v1095, 1.442695
    %v1107 = vpow.pop %v1106
    %v1108 = vmul.f32 %v1096, 1.442695
    %v1109 = vpow.pop %v1108
    %v1110 = vmul.f32 %v1097, 1.442695
    %v1111 = vpow.pop %v1110
    %v1112 = vmul.f32 %v1098, 1.442695
    %v1113 = vpow.pop %v1112
    %v1114 = vmul.f32 %v1099, 1.442695
    %v1115 = vpow.pop %v1114
    %v1116 = vsel %vm731, %v1101, 0.0
    %1117 = vadd.xlane.f32.xlu0 %v1116
    %v1118 = vpop.xlane.xlu0 %1117
    %v1119 = vsel %vm731, %v1103, 0.0
    %1120 = vadd.xlane.f32.xlu0 %v1119
    %v1121 = vpop.xlane.xlu0 %1120
    %v1122 = vsel %vm731, %v1105, 0.0
    %1123 = vadd.xlane.f32.xlu0 %v1122
    %v1124 = vpop.xlane.xlu0 %1123
    %v1125 = vsel %vm731, %v1107, 0.0
    %1126 = vadd.xlane.f32.xlu0 %v1125
    %v1127 = vpop.xlane.xlu0 %1126
    %v1128 = vsel %vm731, %v1109, 0.0
    %1129 = vadd.xlane.f32.xlu0 %v1128
    %v1130 = vpop.xlane.xlu0 %1129
    %v1131 = vsel %vm731, %v1111, 0.0
    %1132 = vadd.xlane.f32.xlu0 %v1131
    %v1133 = vpop.xlane.xlu0 %1132
    %v1134 = vsel %vm731, %v1113, 0.0
    %1135 = vadd.xlane.f32.xlu0 %v1134
    %v1136 = vpop.xlane.xlu0 %1135
    %v1137 = vsel %vm731, %v1115, 0.0
    %1138 = vadd.xlane.f32.xlu0 %v1137
    %v1139 = vpop.xlane.xlu0 %1138
    %v1140 = vrcp.pop %v1118
    %v1141 = vmul.f32 %v1101, %v1140
    %v1142 = vrcp.pop %v1121
    %v1143 = vmul.f32 %v1103, %v1142
    %v1144 = vrcp.pop %v1124
    %v1145 = vmul.f32 %v1105, %v1144
    %v1146 = vrcp.pop %v1127
    %v1147 = vmul.f32 %v1107, %v1146
    %v1148 = vrcp.pop %v1130
    %v1149 = vmul.f32 %v1109, %v1148
    %v1150 = vrcp.pop %v1133
    %v1151 = vmul.f32 %v1111, %v1150
    %v1152 = vrcp.pop %v1136
    %v1153 = vmul.f32 %v1113, %v1152
    %v1154 = vrcp.pop %v1139
    %v1155 = vmul.f32 %v1115, %v1154
    %v1157 = vsel %vm731, %v1141, 0
    %v1160 = vsel %vm731, %v1143, 0
    %1162 = vmatprep.subr.mxu0 0.0
    %1163 = vmatpush1.msra.mxu0 %v655
    %1164 = vmatprep.subr.mxu0 0.0
    %1165 = vmatpush1.msra.mxu0 0.0
    %1166 = vmatprep.subr.mxu0 0.0
    %1167 = vmatpush1.msra.mxu0 0.0
    %1168 = vmatprep.subr.mxu0 0.0
    %1169 = vmatpush1.msra.mxu0 0.0
    %1170 = vmatprep.subr.mxu0 0.0
    %1171 = vmatpush1.msra.mxu0 0.0
    %1172 = vmatprep.subr.mxu0 0.0
    %1173 = vmatpush1.msra.mxu0 0.0
    %1174 = vmatprep.subr.mxu0 0.0
    %1175 = vmatpush1.msra.mxu0 0.0
    %1176 = vmatprep.subr.mxu0 0.0
    %1177 = vmatpush1.msra.mxu0 0.0
    %1178 = vmatprep.subr.mxu0 0.0
    %1179 = vmatpush1.msra.mxu0 0.0
    %1180 = vmatprep.subr.mxu0 0.0
    %1181 = vmatpush1.msra.mxu0 0.0
    %1182 = vmatprep.subr.mxu0 0.0
    %1183 = vmatpush1.msra.mxu0 0.0
    %1184 = vmatprep.subr.mxu0 0.0
    %1185 = vmatpush1.msra.mxu0 0.0
    %1186 = vmatprep.subr.mxu0 0.0
    %1187 = vmatpush1.msra.mxu0 0.0
    %1188 = vmatprep.subr.mxu0 0.0
    %1189 = vmatpush1.msra.mxu0 0.0
    %1190 = vmatprep.subr.mxu0 0.0
    %1191 = vmatpush1.msra.mxu0 0.0
    %1192 = vmatprep.subr.mxu0 0.0
    %1193 = vmatpush1.msra.mxu0 0.0
    %1194 = vmatprep.subr.mxu0 0.0
    %1195 = vmatpush1.msra.mxu0 0.0
    %1196 = vmatprep.subr.mxu0 0.0
    %1197 = vmatpush1.msra.mxu0 0.0
    %1198 = vmatprep.subr.mxu0 0.0
    %1199 = vmatpush1.msra.mxu0 0.0
    %1200 = vmatprep.subr.mxu0 0.0
    %1201 = vmatpush1.msra.mxu0 0.0
    %1202 = vmatprep.subr.mxu0 0.0
    %1203 = vmatpush1.msra.mxu0 0.0
    %1204 = vmatprep.subr.mxu0 0.0
    %1205 = vmatpush1.msra.mxu0 0.0
    %1206 = vmatprep.subr.mxu0 0.0
    %1207 = vmatpush1.msra.mxu0 0.0
    %1208 = vmatprep.subr.mxu0 0.0
    %1209 = vmatpush1.msra.mxu0 0.0
    %1210 = vmatprep.subr.mxu0 0.0
    %1211 = vmatpush1.msra.mxu0 0.0
    %1212 = vmatprep.subr.mxu0 0.0
    %1213 = vmatpush1.msra.mxu0 0.0
    %1214 = vmatprep.subr.mxu0 0.0
    %1215 = vmatpush1.msra.mxu0 0.0
    %1216 = vmatprep.subr.mxu0 0.0
    %1217 = vmatpush1.msra.mxu0 0.0
    %1218 = vmatprep.subr.mxu0 0.0
    %1219 = vmatpush1.msra.mxu0 0.0
    %1220 = vmatprep.subr.mxu0 0.0
    %1221 = vmatpush1.msra.mxu0 0.0
    %1222 = vmatprep.subr.mxu0 0.0
    %1223 = vmatpush1.msra.mxu0 0.0
    %1224 = vmatprep.subr.mxu0 0.0
    %1225 = vmatpush1.msra.mxu0 0.0
    %1226 = vmatprep.mubr.f32.mxu0 0.0
    %1227 = vmatmul.mubr.f32.gmra.mrb[0].mxu0 %v1157
    %v1228 = vpop.f32.mrb[0].mxu0
    %v1229 = vadd.f32 0.0, %v1228
    %v1230 = vpop.f32.mrb[0].mxu0
    %1231 = vmatprep.mubr.f32.mxu0 0.0
    %1232 = vmatmul.mubr.f32.gmra.mrb[0].mxu0 %v1160
    %v1233 = vpop.f32.mrb[0].mxu0
    %v1234 = vadd.f32 0.0, %v1233
    %v1235 = vpop.f32.mrb[0].mxu0
    %1236 = vdwg.mxu0
    %v1238 = vsel %vm731, %v1145, 0
    %v1241 = vsel %vm731, %v1147, 0
    %1243 = vmatprep.subr.mxu0 0.0
    %1244 = vmatpush1.msra.mxu0 %v656
    %1245 = vmatprep.subr.mxu0 0.0
    %1246 = vmatpush1.msra.mxu0 0.0
    %1247 = vmatprep.subr.mxu0 0.0
    %1248 = vmatpush1.msra.mxu0 0.0
    %1249 = vmatprep.subr.mxu0 0.0
    %1250 = vmatpush1.msra.mxu0 0.0
    %1251 = vmatprep.subr.mxu0 0.0
    %1252 = vmatpush1.msra.mxu0 0.0
    %1253 = vmatprep.subr.mxu0 0.0
    %1254 = vmatpush1.msra.mxu0 0.0
    %1255 = vmatprep.subr.mxu0 0.0
    %1256 = vmatpush1.msra.mxu0 0.0
    %1257 = vmatprep.subr.mxu0 0.0
    %1258 = vmatpush1.msra.mxu0 0.0
    %1259 = vmatprep.subr.mxu0 0.0
    %1260 = vmatpush1.msra.mxu0 0.0
    %1261 = vmatprep.subr.mxu0 0.0
    %1262 = vmatpush1.msra.mxu0 0.0
    %1263 = vmatprep.subr.mxu0 0.0
    %1264 = vmatpush1.msra.mxu0 0.0
    %1265 = vmatprep.subr.mxu0 0.0
    %1266 = vmatpush1.msra.mxu0 0.0
    %1267 = vmatprep.subr.mxu0 0.0
    %1268 = vmatpush1.msra.mxu0 0.0
    %1269 = vmatprep.subr.mxu0 0.0
    %1270 = vmatpush1.msra.mxu0 0.0
    %1271 = vmatprep.subr.mxu0 0.0
    %1272 = vmatpush1.msra.mxu0 0.0
    %1273 = vmatprep.subr.mxu0 0.0
    %1274 = vmatpush1.msra.mxu0 0.0
    %1275 = vmatprep.subr.mxu0 0.0
    %1276 = vmatpush1.msra.mxu0 0.0
    %1277 = vmatprep.subr.mxu0 0.0
    %1278 = vmatpush1.msra.mxu0 0.0
    %1279 = vmatprep.subr.mxu0 0.0
    %1280 = vmatpush1.msra.mxu0 0.0
    %1281 = vmatprep.subr.mxu0 0.0
    %1282 = vmatpush1.msra.mxu0 0.0
    %1283 = vmatprep.subr.mxu0 0.0
    %1284 = vmatpush1.msra.mxu0 0.0
    %1285 = vmatprep.subr.mxu0 0.0
    %1286 = vmatpush1.msra.mxu0 0.0
    %1287 = vmatprep.subr.mxu0 0.0
    %1288 = vmatpush1.msra.mxu0 0.0
    %1289 = vmatprep.subr.mxu0 0.0
    %1290 = vmatpush1.msra.mxu0 0.0
    %1291 = vmatprep.subr.mxu0 0.0
    %1292 = vmatpush1.msra.mxu0 0.0
    %1293 = vmatprep.subr.mxu0 0.0
    %1294 = vmatpush1.msra.mxu0 0.0
    %1295 = vmatprep.subr.mxu0 0.0
    %1296 = vmatpush1.msra.mxu0 0.0
    %1297 = vmatprep.subr.mxu0 0.0
    %1298 = vmatpush1.msra.mxu0 0.0
    %1299 = vmatprep.subr.mxu0 0.0
    %1300 = vmatpush1.msra.mxu0 0.0
    %1301 = vmatprep.subr.mxu0 0.0
    %1302 = vmatpush1.msra.mxu0 0.0
    %1303 = vmatprep.subr.mxu0 0.0
    %1304 = vmatpush1.msra.mxu0 0.0
    %1305 = vmatprep.subr.mxu0 0.0
    %1306 = vmatpush1.msra.mxu0 0.0
    %1307 = vmatprep.mubr.f32.mxu0 0.0
    %1308 = vmatmul.mubr.f32.gmra.mrb[0].mxu0 %v1238
    %v1309 = vpop.f32.mrb[0].mxu0
    %v1310 = vadd.f32 0.0, %v1309
    %v1311 = vpop.f32.mrb[0].mxu0
    %1312 = vmatprep.mubr.f32.mxu0 0.0
    %1313 = vmatmul.mubr.f32.gmra.mrb[0].mxu0 %v1241
    %v1314 = vpop.f32.mrb[0].mxu0
    %v1315 = vadd.f32 0.0, %v1314
    %v1316 = vpop.f32.mrb[0].mxu0
    %1317 = vdwg.mxu0
    %v1319 = vsel %vm731, %v1149, 0
    %v1322 = vsel %vm731, %v1151, 0
    %1324 = vmatprep.subr.mxu0 0.0
    %1325 = vmatpush1.msra.mxu0 %v723
    %1326 = vmatprep.subr.mxu0 0.0
    %1327 = vmatpush1.msra.mxu0 0.0
    %1328 = vmatprep.subr.mxu0 0.0
    %1329 = vmatpush1.msra.mxu0 0.0
    %1330 = vmatprep.subr.mxu0 0.0
    %1331 = vmatpush1.msra.mxu0 0.0
    %1332 = vmatprep.subr.mxu0 0.0
    %1333 = vmatpush1.msra.mxu0 0.0
    %1334 = vmatprep.subr.mxu0 0.0
    %1335 = vmatpush1.msra.mxu0 0.0
    %1336 = vmatprep.subr.mxu0 0.0
    %1337 = vmatpush1.msra.mxu0 0.0
    %1338 = vmatprep.subr.mxu0 0.0
    %1339 = vmatpush1.msra.mxu0 0.0
    %1340 = vmatprep.subr.mxu0 0.0
    %1341 = vmatpush1.msra.mxu0 0.0
    %1342 = vmatprep.subr.mxu0 0.0
    %1343 = vmatpush1.msra.mxu0 0.0
    %1344 = vmatprep.subr.mxu0 0.0
    %1345 = vmatpush1.msra.mxu0 0.0
    %1346 = vmatprep.subr.mxu0 0.0
    %1347 = vmatpush1.msra.mxu0 0.0
    %1348 = vmatprep.subr.mxu0 0.0
    %1349 = vmatpush1.msra.mxu0 0.0
    %1350 = vmatprep.subr.mxu0 0.0
    %1351 = vmatpush1.msra.mxu0 0.0
    %1352 = vmatprep.subr.mxu0 0.0
    %1353 = vmatpush1.msra.mxu0 0.0
    %1354 = vmatprep.subr.mxu0 0.0
    %1355 = vmatpush1.msra.mxu0 0.0
    %1356 = vmatprep.subr.mxu0 0.0
    %1357 = vmatpush1.msra.mxu0 0.0
    %1358 = vmatprep.subr.mxu0 0.0
    %1359 = vmatpush1.msra.mxu0 0.0
    %1360 = vmatprep.subr.mxu0 0.0
    %1361 = vmatpush1.msra.mxu0 0.0
    %1362 = vmatprep.subr.mxu0 0.0
    %1363 = vmatpush1.msra.mxu0 0.0
    %1364 = vmatprep.subr.mxu0 0.0
    %1365 = vmatpush1.msra.mxu0 0.0
    %1366 = vmatprep.subr.mxu0 0.0
    %1367 = vmatpush1.msra.mxu0 0.0
    %1368 = vmatprep.subr.mxu0 0.0
    %1369 = vmatpush1.msra.mxu0 0.0
    %1370 = vmatprep.subr.mxu0 0.0
    %1371 = vmatpush1.msra.mxu0 0.0
    %1372 = vmatprep.subr.mxu0 0.0
    %1373 = vmatpush1.msra.mxu0 0.0
    %1374 = vmatprep.subr.mxu0 0.0
    %1375 = vmatpush1.msra.mxu0 0.0
    %1376 = vmatprep.subr.mxu0 0.0
    %1377 = vmatpush1.msra.mxu0 0.0
    %1378 = vmatprep.subr.mxu0 0.0
    %1379 = vmatpush1.msra.mxu0 0.0
    %1380 = vmatprep.subr.mxu0 0.0
    %1381 = vmatpush1.msra.mxu0 0.0
    %1382 = vmatprep.subr.mxu0 0.0
    %1383 = vmatpush1.msra.mxu0 0.0
    %1384 = vmatprep.subr.mxu0 0.0
    %1385 = vmatpush1.msra.mxu0 0.0
    %1386 = vmatprep.subr.mxu0 0.0
    %1387 = vmatpush1.msra.mxu0 0.0
    %1388 = vmatprep.mubr.f32.mxu0 0.0
    %1389 = vmatmul.mubr.f32.gmra.mrb[0].mxu0 %v1319
    %v1390 = vpop.f32.mrb[0].mxu0
    %v1391 = vadd.f32 0.0, %v1390
    %v1392 = vpop.f32.mrb[0].mxu0
    %1393 = vmatprep.mubr.f32.mxu0 0.0
    %1394 = vmatmul.mubr.f32.gmra.mrb[0].mxu0 %v1322
    %v1395 = vpop.f32.mrb[0].mxu0
    %v1396 = vadd.f32 0.0, %v1395
    %v1397 = vpop.f32.mrb[0].mxu0
    %1398 = vdwg.mxu0
    %v1400 = vsel %vm731, %v1153, 0
    %v1403 = vsel %vm731, %v1155, 0
    %1405 = vmatprep.subr.mxu0 0.0
    %1406 = vmatpush1.msra.mxu0 %v724
    %1407 = vmatprep.subr.mxu0 0.0
    %1408 = vmatpush1.msra.mxu0 0.0
    %1409 = vmatprep.subr.mxu0 0.0
    %1410 = vmatpush1.msra.mxu0 0.0
    %1411 = vmatprep.subr.mxu0 0.0
    %1412 = vmatpush1.msra.mxu0 0.0
    %1413 = vmatprep.subr.mxu0 0.0
    %1414 = vmatpush1.msra.mxu0 0.0
    %1415 = vmatprep.subr.mxu0 0.0
    %1416 = vmatpush1.msra.mxu0 0.0
    %1417 = vmatprep.subr.mxu0 0.0
    %1418 = vmatpush1.msra.mxu0 0.0
    %1419 = vmatprep.subr.mxu0 0.0
    %1420 = vmatpush1.msra.mxu0 0.0
    %1421 = vmatprep.subr.mxu0 0.0
    %1422 = vmatpush1.msra.mxu0 0.0
    %1423 = vmatprep.subr.mxu0 0.0
    %1424 = vmatpush1.msra.mxu0 0.0
    %1425 = vmatprep.subr.mxu0 0.0
    %1426 = vmatpush1.msra.mxu0 0.0
    %1427 = vmatprep.subr.mxu0 0.0
    %1428 = vmatpush1.msra.mxu0 0.0
    %1429 = vmatprep.subr.mxu0 0.0
    %1430 = vmatpush1.msra.mxu0 0.0
    %1431 = vmatprep.subr.mxu0 0.0
    %1432 = vmatpush1.msra.mxu0 0.0
    %1433 = vmatprep.subr.mxu0 0.0
    %1434 = vmatpush1.msra.mxu0 0.0
    %1435 = vmatprep.subr.mxu0 0.0
    %1436 = vmatpush1.msra.mxu0 0.0
    %1437 = vmatprep.subr.mxu0 0.0
    %1438 = vmatpush1.msra.mxu0 0.0
    %1439 = vmatprep.subr.mxu0 0.0
    %1440 = vmatpush1.msra.mxu0 0.0
    %1441 = vmatprep.subr.mxu0 0.0
    %1442 = vmatpush1.msra.mxu0 0.0
    %1443 = vmatprep.subr.mxu0 0.0
    %1444 = vmatpush1.msra.mxu0 0.0
    %1445 = vmatprep.subr.mxu0 0.0
    %1446 = vmatpush1.msra.mxu0 0.0
    %1447 = vmatprep.subr.mxu0 0.0
    %1448 = vmatpush1.msra.mxu0 0.0
    %1449 = vmatprep.subr.mxu0 0.0
    %1450 = vmatpush1.msra.mxu0 0.0
    %1451 = vmatprep.subr.mxu0 0.0
    %1452 = vmatpush1.msra.mxu0 0.0
    %1453 = vmatprep.subr.mxu0 0.0
    %1454 = vmatpush1.msra.mxu0 0.0
    %1455 = vmatprep.subr.mxu0 0.0
    %1456 = vmatpush1.msra.mxu0 0.0
    %1457 = vmatprep.subr.mxu0 0.0
    %1458 = vmatpush1.msra.mxu0 0.0
    %1459 = vmatprep.subr.mxu0 0.0
    %1460 = vmatpush1.msra.mxu0 0.0
    %1461 = vmatprep.subr.mxu0 0.0
    %1462 = vmatpush1.msra.mxu0 0.0
    %1463 = vmatprep.subr.mxu0 0.0
    %1464 = vmatpush1.msra.mxu0 0.0
    %1465 = vmatprep.subr.mxu0 0.0
    %1466 = vmatpush1.msra.mxu0 0.0
    %1467 = vmatprep.subr.mxu0 0.0
    %1468 = vmatpush1.msra.mxu0 0.0
    %1469 = vmatprep.mubr.f32.mxu0 0.0
    %1470 = vmatmul.mubr.f32.gmra.mrb[0].mxu0 %v1400
    %v1471 = vpop.f32.mrb[0].mxu0
    %v1472 = vadd.f32 0.0, %v1471
    %v1473 = vpop.f32.mrb[0].mxu0
    %1474 = vmatprep.mubr.f32.mxu0 0.0
    %1475 = vmatmul.mubr.f32.gmra.mrb[0].mxu0 %v1403
    %v1476 = vpop.f32.mrb[0].mxu0
    %v1477 = vadd.f32 0.0, %v1476
    %v1478 = vpop.f32.mrb[0].mxu0
    %1479 = vdwg.mxu0
    %v1480 = vcombine.low %v1229, %v1310
    %v1481 = vcombine.high %v1229, %v1310
    %v1483 = vunpack.c.l.s4 1983009808
    %v1484 = vunpack.c.0.s8 %v1483
    %v1485 = vlaneseq
    %v1486 = vshrl.u32 %v1485, 7
    %v1487 = vsub.s32 %v1484, %v1486
    %v1488 = vrot.slane %v1480, %v1487
    %v1490 = vunpack.c.l.s4 1983009808
    %v1491 = vunpack.c.0.s8 %v1490
    %v1492 = vlaneseq
    %v1493 = vshrl.u32 %v1492, 7
    %v1494 = vsub.s32 %v1491, %v1493
    %v1495 = vrot.slane %v1481, %v1494
    %v1496 = vcombine.low %v1234, %v1315
    %v1497 = vcombine.high %v1234, %v1315
    %v1499 = vunpack.c.l.s4 1983009808
    %v1500 = vunpack.c.0.s8 %v1499
    %v1501 = vlaneseq
    %v1502 = vshrl.u32 %v1501, 7
    %v1503 = vsub.s32 %v1500, %v1502
    %v1504 = vrot.slane %v1496, %v1503
    %v1506 = vunpack.c.l.s4 1983009808
    %v1507 = vunpack.c.0.s8 %v1506
    %v1508 = vlaneseq
    %v1509 = vshrl.u32 %v1508, 7
    %v1510 = vsub.s32 %v1507, %v1509
    %v1511 = vrot.slane %v1497, %v1510
    %v1512 = vcombine.low %v1488, %v1504
    %v1513 = vcombine.high %v1488, %v1504
    %v1515 = vunpack.c.l.s4 1934713408
    %v1516 = vunpack.c.0.s8 %v1515
    %v1517 = vlaneseq
    %v1518 = vshrl.u32 %v1517, 7
    %v1519 = vsub.s32 %v1516, %v1518
    %v1520 = vrot.slane %v1512, %v1519
    %v1522 = vunpack.c.l.s4 1934713408
    %v1523 = vunpack.c.0.s8 %v1522
    %v1524 = vlaneseq
    %v1525 = vshrl.u32 %v1524, 7
    %v1526 = vsub.s32 %v1523, %v1525
    %v1527 = vrot.slane %v1513, %v1526
    %v1528 = vcombine.low %v1495, %v1511
    %v1529 = vcombine.high %v1495, %v1511
    %v1531 = vunpack.c.l.s4 1934713408
    %v1532 = vunpack.c.0.s8 %v1531
    %v1533 = vlaneseq
    %v1534 = vshrl.u32 %v1533, 7
    %v1535 = vsub.s32 %v1532, %v1534
    %v1536 = vrot.slane %v1528, %v1535
    %v1538 = vunpack.c.l.s4 1934713408
    %v1539 = vunpack.c.0.s8 %v1538
    %v1540 = vlaneseq
    %v1541 = vshrl.u32 %v1540, 7
    %v1542 = vsub.s32 %v1539, %v1541
    %v1543 = vrot.slane %v1529, %v1542
    %v1544 = vcombine.high %v1520, 0.0
    %v1545 = vcombine.high %v1527, 0.0
    %v1546 = vcombine.high %v1536, 0.0
    %v1547 = vcombine.high %v1543, 0.0
    %v1548 = vcombine.low %v1391, %v1472
    %v1549 = vcombine.high %v1391, %v1472
    %v1551 = vunpack.c.l.s4 1983009808
    %v1552 = vunpack.c.0.s8 %v1551
    %v1553 = vlaneseq
    %v1554 = vshrl.u32 %v1553, 7
    %v1555 = vsub.s32 %v1552, %v1554
    %v1556 = vrot.slane %v1548, %v1555
    %v1558 = vunpack.c.l.s4 1983009808
    %v1559 = vunpack.c.0.s8 %v1558
    %v1560 = vlaneseq
    %v1561 = vshrl.u32 %v1560, 7
    %v1562 = vsub.s32 %v1559, %v1561
    %v1563 = vrot.slane %v1549, %v1562
    %v1564 = vcombine.low %v1396, %v1477
    %v1565 = vcombine.high %v1396, %v1477
    %v1567 = vunpack.c.l.s4 1983009808
    %v1568 = vunpack.c.0.s8 %v1567
    %v1569 = vlaneseq
    %v1570 = vshrl.u32 %v1569, 7
    %v1571 = vsub.s32 %v1568, %v1570
    %v1572 = vrot.slane %v1564, %v1571
    %v1574 = vunpack.c.l.s4 1983009808
    %v1575 = vunpack.c.0.s8 %v1574
    %v1576 = vlaneseq
    %v1577 = vshrl.u32 %v1576, 7
    %v1578 = vsub.s32 %v1575, %v1577
    %v1579 = vrot.slane %v1565, %v1578
    %v1580 = vcombine.low %v1556, %v1572
    %v1581 = vcombine.high %v1556, %v1572
    %v1583 = vunpack.c.l.s4 1934713408
    %v1584 = vunpack.c.0.s8 %v1583
    %v1585 = vlaneseq
    %v1586 = vshrl.u32 %v1585, 7
    %v1587 = vsub.s32 %v1584, %v1586
    %v1588 = vrot.slane %v1580, %v1587
    %v1590 = vunpack.c.l.s4 1934713408
    %v1591 = vunpack.c.0.s8 %v1590
    %v1592 = vlaneseq
    %v1593 = vshrl.u32 %v1592, 7
    %v1594 = vsub.s32 %v1591, %v1593
    %v1595 = vrot.slane %v1581, %v1594
    %v1596 = vcombine.low %v1563, %v1579
    %v1597 = vcombine.high %v1563, %v1579
    %v1599 = vunpack.c.l.s4 1934713408
    %v1600 = vunpack.c.0.s8 %v1599
    %v1601 = vlaneseq
    %v1602 = vshrl.u32 %v1601, 7
    %v1603 = vsub.s32 %v1600, %v1602
    %v1604 = vrot.slane %v1596, %v1603
    %v1606 = vunpack.c.l.s4 1934713408
    %v1607 = vunpack.c.0.s8 %v1606
    %v1608 = vlaneseq
    %v1609 = vshrl.u32 %v1608, 7
    %v1610 = vsub.s32 %v1607, %v1609
    %v1611 = vrot.slane %v1597, %v1610
    %v1612 = vcombine.high %v1588, 0.0
    %v1613 = vcombine.high %v1595, 0.0
    %v1614 = vcombine.high %v1604, 0.0
    %v1615 = vcombine.high %v1611, 0.0
    %v1616 = vcombine.low %v1520, %v1527
    %v1618 = vunpack.c.l.s4 1983009808
    %v1619 = vunpack.c.0.s8 %v1618
    %v1620 = vlaneseq
    %v1621 = vshrl.u32 %v1620, 7
    %v1622 = vsub.s32 %v1619, %v1621
    %v1623 = vrot.slane %v1616, %v1622
    %v1624 = vcombine.low %v1544, %v1545
    %v1626 = vunpack.c.l.s4 1983009808
    %v1627 = vunpack.c.0.s8 %v1626
    %v1628 = vlaneseq
    %v1629 = vshrl.u32 %v1628, 7
    %v1630 = vsub.s32 %v1627, %v1629
    %v1631 = vrot.slane %v1624, %v1630
    %v1632 = vcombine.low %v1536, %v1543
    %v1634 = vunpack.c.l.s4 1983009808
    %v1635 = vunpack.c.0.s8 %v1634
    %v1636 = vlaneseq
    %v1637 = vshrl.u32 %v1636, 7
    %v1638 = vsub.s32 %v1635, %v1637
    %v1639 = vrot.slane %v1632, %v1638
    %v1640 = vcombine.low %v1546, %v1547
    %v1642 = vunpack.c.l.s4 1983009808
    %v1643 = vunpack.c.0.s8 %v1642
    %v1644 = vlaneseq
    %v1645 = vshrl.u32 %v1644, 7
    %v1646 = vsub.s32 %v1643, %v1645
    %v1647 = vrot.slane %v1640, %v1646
    %v1648 = vcombine.low %v1623, %v1631
    %v1649 = vcombine.high %v1623, %v1631
    %v1651 = vunpack.c.l.s4 1934713408
    %v1652 = vunpack.c.0.s8 %v1651
    %v1653 = vlaneseq
    %v1654 = vshrl.u32 %v1653, 7
    %v1655 = vsub.s32 %v1652, %v1654
    %v1656 = vrot.slane %v1648, %v1655
    %v1658 = vunpack.c.l.s4 1934713408
    %v1659 = vunpack.c.0.s8 %v1658
    %v1660 = vlaneseq
    %v1661 = vshrl.u32 %v1660, 7
    %v1662 = vsub.s32 %v1659, %v1661
    %v1663 = vrot.slane %v1649, %v1662
    %v1664 = vcombine.low %v1639, %v1647
    %v1665 = vcombine.high %v1639, %v1647
    %v1667 = vunpack.c.l.s4 1934713408
    %v1668 = vunpack.c.0.s8 %v1667
    %v1669 = vlaneseq
    %v1670 = vshrl.u32 %v1669, 7
    %v1671 = vsub.s32 %v1668, %v1670
    %v1672 = vrot.slane %v1664, %v1671
    %v1674 = vunpack.c.l.s4 1934713408
    %v1675 = vunpack.c.0.s8 %v1674
    %v1676 = vlaneseq
    %v1677 = vshrl.u32 %v1676, 7
    %v1678 = vsub.s32 %v1675, %v1677
    %v1679 = vrot.slane %v1665, %v1678
    %v1680 = vcombine.low %v1656, %v1672
    %v1681 = vcombine.high %v1656, %v1672
    %v1682 = vcombine.low %v1663, %v1679
    %v1683 = vcombine.high %v1663, %v1679
    %v1684 = vcombine.low %v1588, %v1595
    %v1686 = vunpack.c.l.s4 1983009808
    %v1687 = vunpack.c.0.s8 %v1686
    %v1688 = vlaneseq
    %v1689 = vshrl.u32 %v1688, 7
    %v1690 = vsub.s32 %v1687, %v1689
    %v1691 = vrot.slane %v1684, %v1690
    %v1692 = vcombine.low %v1612, %v1613
    %v1694 = vunpack.c.l.s4 1983009808
    %v1695 = vunpack.c.0.s8 %v1694
    %v1696 = vlaneseq
    %v1697 = vshrl.u32 %v1696, 7
    %v1698 = vsub.s32 %v1695, %v1697
    %v1699 = vrot.slane %v1692, %v1698
    %v1700 = vcombine.low %v1604, %v1611
    %v1702 = vunpack.c.l.s4 1983009808
    %v1703 = vunpack.c.0.s8 %v1702
    %v1704 = vlaneseq
    %v1705 = vshrl.u32 %v1704, 7
    %v1706 = vsub.s32 %v1703, %v1705
    %v1707 = vrot.slane %v1700, %v1706
    %v1708 = vcombine.low %v1614, %v1615
    %v1710 = vunpack.c.l.s4 1983009808
    %v1711 = vunpack.c.0.s8 %v1710
    %v1712 = vlaneseq
    %v1713 = vshrl.u32 %v1712, 7
    %v1714 = vsub.s32 %v1711, %v1713
    %v1715 = vrot.slane %v1708, %v1714
    %v1716 = vcombine.low %v1691, %v1699
    %v1717 = vcombine.high %v1691, %v1699
    %v1719 = vunpack.c.l.s4 1934713408
    %v1720 = vunpack.c.0.s8 %v1719
    %v1721 = vlaneseq
    %v1722 = vshrl.u32 %v1721, 7
    %v1723 = vsub.s32 %v1720, %v1722
    %v1724 = vrot.slane %v1716, %v1723
    %v1726 = vunpack.c.l.s4 1934713408
    %v1727 = vunpack.c.0.s8 %v1726
    %v1728 = vlaneseq
    %v1729 = vshrl.u32 %v1728, 7
    %v1730 = vsub.s32 %v1727, %v1729
    %v1731 = vrot.slane %v1717, %v1730
    %v1732 = vcombine.low %v1707, %v1715
    %v1733 = vcombine.high %v1707, %v1715
    %v1735 = vunpack.c.l.s4 1934713408
    %v1736 = vunpack.c.0.s8 %v1735
    %v1737 = vlaneseq
    %v1738 = vshrl.u32 %v1737, 7
    %v1739 = vsub.s32 %v1736, %v1738
    %v1740 = vrot.slane %v1732, %v1739
    %v1742 = vunpack.c.l.s4 1934713408
    %v1743 = vunpack.c.0.s8 %v1742
    %v1744 = vlaneseq
    %v1745 = vshrl.u32 %v1744, 7
    %v1746 = vsub.s32 %v1743, %v1745
    %v1747 = vrot.slane %v1733, %v1746
    %v1748 = vcombine.low %v1724, %v1740
    %v1749 = vcombine.high %v1724, %v1740
    %v1750 = vcombine.low %v1731, %v1747
    %v1751 = vcombine.high %v1731, %v1747
    %1754 = vrot.lane.b32.xlu0 %v1681, 8
    %v1755 = vpop.permute.xlu0 %1754
    %1756 = vrot.lane.b32.xlu0 %v1749, 8
    %v1757 = vpop.permute.xlu0 %1756
    %1762 = vrot.lane.b32.xlu0 %v1682, 16
    %v1763 = vpop.permute.xlu0 %1762
    %1764 = vrot.lane.b32.xlu0 %v1750, 16
    %v1765 = vpop.permute.xlu0 %1764
    %1770 = vrot.lane.b32.xlu0 %v1683, 24
    %v1771 = vpop.permute.xlu0 %1770
    %1772 = vrot.lane.b32.xlu0 %v1751, 24
    %v1773 = vpop.permute.xlu0 %1772
    %v1776 = vsel %vm731, %v1680, %v1755
    %v1777 = vsel %vm731, %v1748, %v1757
    %vm1778 = vcmask 130048
    %v1779 = vsel %vm1778, %v1776, %v1763
    %v1780 = vsel %vm1778, %v1777, %v1765
    %vm1781 = vcmask 195584
    %v1782 = vsel %vm1781, %v1779, %v1771
    %v1783 = vsel %vm1781, %v1780, %v1773
    %v1784 = vld [vmem:[#allocation2] sm:$0xff]
    %v1785 = vld [vmem:[#allocation2 + $0x8] sm:$0xff]
    %v1786 = vld [vmem:[#allocation2 + $0x10] sm:$0xff]
    %v1787 = vld [vmem:[#allocation2 + $0x18] sm:$0xff]
    %v1789 = vsel %vm41, %v1782, 0
    %v1792 = vsel %vm41, %v1783, 0
    %1794 = vmatprep.subr.mxu0 0.0
    %1795 = vmatpush1.msra.mxu0 %v1784
    %1796 = vmatprep.subr.mxu0 0.0
    %1797 = vmatpush1.msra.mxu0 %v1785
    %1798 = vmatprep.subr.mxu0 0.0
    %1799 = vmatpush1.msra.mxu0 %v1786
    %1800 = vmatprep.subr.mxu0 0.0
    %1801 = vmatpush1.msra.mxu0 %v1787
    %1802 = vmatprep.subr.mxu0 0.0
    %1803 = vmatpush1.msra.mxu0 0.0
    %1804 = vmatprep.subr.mxu0 0.0
    %1805 = vmatpush1.msra.mxu0 0.0
    %1806 = vmatprep.subr.mxu0 0.0
    %1807 = vmatpush1.msra.mxu0 0.0
    %1808 = vmatprep.subr.mxu0 0.0
    %1809 = vmatpush1.msra.mxu0 0.0
    %1810 = vmatprep.subr.mxu0 0.0
    %1811 = vmatpush1.msra.mxu0 0.0
    %1812 = vmatprep.subr.mxu0 0.0
    %1813 = vmatpush1.msra.mxu0 0.0
    %1814 = vmatprep.subr.mxu0 0.0
    %1815 = vmatpush1.msra.mxu0 0.0
    %1816 = vmatprep.subr.mxu0 0.0
    %1817 = vmatpush1.msra.mxu0 0.0
    %1818 = vmatprep.subr.mxu0 0.0
    %1819 = vmatpush1.msra.mxu0 0.0
    %1820 = vmatprep.subr.mxu0 0.0
    %1821 = vmatpush1.msra.mxu0 0.0
    %1822 = vmatprep.subr.mxu0 0.0
    %1823 = vmatpush1.msra.mxu0 0.0
    %1824 = vmatprep.subr.mxu0 0.0
    %1825 = vmatpush1.msra.mxu0 0.0
    %1826 = vmatprep.subr.mxu0 0.0
    %1827 = vmatpush1.msra.mxu0 0.0
    %1828 = vmatprep.subr.mxu0 0.0
    %1829 = vmatpush1.msra.mxu0 0.0
    %1830 = vmatprep.subr.mxu0 0.0
    %1831 = vmatpush1.msra.mxu0 0.0
    %1832 = vmatprep.subr.mxu0 0.0
    %1833 = vmatpush1.msra.mxu0 0.0
    %1834 = vmatprep.subr.mxu0 0.0
    %1835 = vmatpush1.msra.mxu0 0.0
    %1836 = vmatprep.subr.mxu0 0.0
    %1837 = vmatpush1.msra.mxu0 0.0
    %1838 = vmatprep.subr.mxu0 0.0
    %1839 = vmatpush1.msra.mxu0 0.0
    %1840 = vmatprep.subr.mxu0 0.0
    %1841 = vmatpush1.msra.mxu0 0.0
    %1842 = vmatprep.subr.mxu0 0.0
    %1843 = vmatpush1.msra.mxu0 0.0
    %1844 = vmatprep.subr.mxu0 0.0
    %1845 = vmatpush1.msra.mxu0 0.0
    %1846 = vmatprep.subr.mxu0 0.0
    %1847 = vmatpush1.msra.mxu0 0.0
    %1848 = vmatprep.subr.mxu0 0.0
    %1849 = vmatpush1.msra.mxu0 0.0
    %1850 = vmatprep.subr.mxu0 0.0
    %1851 = vmatpush1.msra.mxu0 0.0
    %1852 = vmatprep.subr.mxu0 0.0
    %1853 = vmatpush1.msra.mxu0 0.0
    %1854 = vmatprep.subr.mxu0 0.0
    %1855 = vmatpush1.msra.mxu0 0.0
    %1856 = vmatprep.subr.mxu0 0.0
    %1857 = vmatpush1.msra.mxu0 0.0
    %1858 = vmatprep.mubr.f32.mxu0 0.0
    %1859 = vmatmul.mubr.f32.gmra.mrb[0].mxu0 %v1789
    %v1860 = vpop.f32.mrb[0].mxu0
    %v1861 = vadd.f32 0.0, %v1860
    %v1862 = vpop.f32.mrb[0].mxu0
    %1863 = vmatprep.mubr.f32.mxu0 0.0
    %1864 = vmatmul.mubr.f32.gmra.mrb[0].mxu0 %v1792
    %v1865 = vpop.f32.mrb[0].mxu0
    %v1866 = vadd.f32 0.0, %v1865
    %v1867 = vpop.f32.mrb[0].mxu0
    %1868 = vdwg.mxu0
    %1869 = vst.msk [vmem:[#allocation5] sm:$0xff] %vm41, %v1861
    %1870 = vst.msk [vmem:[#allocation5 + $0x8] sm:$0xff] %vm41, %v1866
    // Predicated region
    $region26: #{attention_forward.1} parent=1 // pred_check
      _
    $region27: #{attention_forward.1} parent=1 // pred_check_branch
      %1872 = sbr.rel (0) target = $region29
    $region28: #{attention_forward.1} parent=1 // pred_region
      %s1874 = ssub.s32 256, 256
      %1875 = vsyncadd [#allocation4], %s1874
      %s1876 = sshll.u32 [#allocation5], 4
      %s1877 = int_to_ptr.vmem [resolvable:$true] %s1876
      %1882 = dma.vmem_to_hbm [thread:$0]  %s1877, 256, %s5, [#allocation4], 128, 128, 8
    $region29: #{attention_forward.1} parent=1 // pred_fallthru
      _
    // Predicated region
    $region30: #{attention_forward.1} parent=1 // pred_check
      _
    $region31: #{attention_forward.1} parent=1 // pred_check_branch
      %1884 = sbr.rel (0) target = $region33
    $region32: #{attention_forward.1} parent=1 // pred_region
      %1885 = dma.done [#allocation4], 256
    $region33: #{attention_forward.1} parent=1 // pred_fallthru
      _
    %1886 = vsyncpa [#allocation3], 1
    %1887 = vsyncpa [#allocation4], 1

</llo_original>
